<compile_context>
chip_gen: v6e
topology: v6e:2x2x1
jax: 0.10.0
libtpu: 0.0.40
codegen_flags: <defaults>
</compile_context>

<pallas_src>
import functools

import jax
import jax.numpy as jnp
from jax.experimental import pallas as pl
from jax.experimental.pallas import tpu as pltpu

_LANE = 128      # vreg lane count
_SUBLANE = 8     # vreg sublane count


def _round_up(x, m):
    return (x + m - 1) // m * m


def _sigmoid(x):
    # sigmoid(x) = 0.5*(tanh(x/2)+1): a single EUP op (tanh) instead of exp+recip.
    return 0.5 * (jnp.tanh(0.5 * x) + 1.0)


def _pick_time_chunk(T, b_block, h_pad, pre_isz, out_isz, *, target, whh_bytes):
    """Largest time-chunk <= target that keeps (double-buffered) blocks within a
    conservative VMEM budget valid on all generations (incl. v7x's 64 MiB VMEM)."""
    per_step = 2 * b_block * h_pad * (4 * pre_isz + out_isz)   # pregate + out, x2 buffers
    budget = 24 * 1024 * 1024
    resident = 2 * whh_bytes + 8 * b_block * h_pad * 4         # W_hh (x2 buf) + carries etc.
    cap = max(1, (budget - resident) // per_step)
    return int(max(1, min(target, T, cap)))


# ----------------------------------------------------------------------------
# Pallas kernel: one grid step == one chunk of t_chunk LSTM time steps for one
# batch block.  h/c carries live in the fori_loop carry (vregs) during a chunk
# and in VMEM scratch between chunks; the time axis is "arbitrary" (sequential),
# the batch-block axis is "parallel".
# ----------------------------------------------------------------------------
def _lstm_kernel(pregate_ref,   # (Tc, Bb, 4*Hp)  proj dtype (bf16/f32): x@W_ih^T + bias
                 whh_ref,       # (Hp, 4*Hp)      mxu dtype (bf16/f32)
                 h0_ref,        # (Bb, Hp)        f32
                 c0_ref,        # (Bb, Hp)        f32
                 out_ref,       # (Tc, Bb, Hp)
                 hT_ref,        # (Bb, Hp)        f32
                 cT_ref,        # (Bb, Hp)        f32
                 h_s, c_s,      # VMEM scratch carries (between chunks), f32
                 *, h_pad, t_chunk, t_total, needs_mask, unroll):
    H = h_pad
    tb = pl.program_id(1)                       # time-chunk index (inner, sequential)

    @pl.when(tb == 0)
    def _():                                    # new batch block: load initial state
        h_s[...] = h0_ref[...]
        c_s[...] = c0_ref[...]

    mxu_dtype = whh_ref.dtype

    def step(i, carry):
        h_prev, c_prev = carry                  # vreg-resident carries (no VMEM round trip)
        # Recurrent matmul; W_hh^T is read from its VMEM ref *inside* the step so a
        # 512 KB weight value is never kept live across the unrolled loop (spills).
        gates = pregate_ref[i].astype(jnp.float32) + jnp.dot(
            h_prev.astype(mxu_dtype), whh_ref[...],
            preferred_element_type=jnp.float32)
        # Lane-aligned gate slices (H_pad is a multiple of 128); PyTorch order i,f,g,o.
        i_g = _sigmoid(gates[:, 0 * H:1 * H])
        f_g = _sigmoid(gates[:, 1 * H:2 * H])
        g_g = jnp.tanh(gates[:, 2 * H:3 * H])
        o_g = _sigmoid(gates[:, 3 * H:4 * H])
        c_new = f_g * c_prev + i_g * g_g
        h_new = o_g * jnp.tanh(c_new)
        out_ref[i] = h_new.astype(out_ref.dtype)
        if needs_mask:
            # Tail predication: padded timesteps (t >= T) must not advance the carries.
            valid = (tb * t_chunk + i) < t_total
            h_new = jnp.where(valid, h_new, h_prev)
            c_new = jnp.where(valid, c_new, c_prev)
        return h_new, c_new

    h_fin, c_fin = jax.lax.fori_loop(0, t_chunk, step, (h_s[...], c_s[...]),
                                     unroll=unroll)

    # Persist carries across chunks (single VMEM store per chunk).
    h_s[...] = h_fin
    c_s[...] = c_fin

    @pl.when(tb == pl.num_programs(1) - 1)
    def _():
        hT_ref[...] = h_fin
        cT_ref[...] = c_fin


# ----------------------------------------------------------------------------
# Glue: gate-aligned padded parameters + hoisted input projection + pallas_call.
# ----------------------------------------------------------------------------
def _pad_gate_params(w_ih, w_hh, b_ih, b_hh, H, H_pad):
    """Pad each gate block of the PyTorch [i|f|g|o] layout to H_pad; return transposed
    weights (I, 4*H_pad), (H_pad, 4*H_pad) and fused bias (1, 4*H_pad) in f32."""
    I = w_ih.shape[1]
    dH = H_pad - H

    wih4 = jnp.pad(w_ih.reshape(4, H, I), ((0, 0), (0, dH), (0, 0)))        # (4,Hp,I)
    whh4 = jnp.pad(w_hh.reshape(4, H, H), ((0, 0), (0, dH), (0, dH)))       # (4,Hp,Hp)
    wih_t = jnp.transpose(wih4, (2, 0, 1)).reshape(I, 4 * H_pad)            # (I,4Hp)
    whh_t = jnp.transpose(whh4, (2, 0, 1)).reshape(H_pad, 4 * H_pad)        # (Hp,4Hp)

    b = jnp.pad((b_ih + b_hh).reshape(4, H), ((0, 0), (0, dH)))
    b = b.reshape(1, 4 * H_pad).astype(jnp.float32)
    return wih_t, whh_t, b


@functools.partial(jax.jit,
                   static_argnames=("mxu_dtype", "target_chunk", "batch_blocks"))
def lstm_pallas(x_btI, w_ih, w_hh, b_ih, b_hh, h0, c0, *,
                mxu_dtype=jnp.bfloat16, target_chunk=64, batch_blocks=1):
    """x_btI: (B, T, I) batch-first.  w_ih: (4H, I), w_hh: (4H, H), biases: (4H,).
    h0, c0: (B, H).  Returns (out (B, T, H), h_T (B, H), c_T (B, H)).
    batch_blocks > 1 splits the batch over a "parallel" grid axis (v7x megacore)."""
    B, T, I = x_btI.shape
    H = w_hh.shape[1]
    dtype = x_btI.dtype

    H_pad = _round_up(H, _LANE)
    B_pad = _round_up(B, _SUBLANE)

    # Batch-block split (defaults to a single block == previous behaviour).
    n_sub = B_pad // _SUBLANE
    nb = max(1, min(int(batch_blocks), n_sub))
    while n_sub % nb:
        nb -= 1
    b_block = B_pad // nb

    proj_dtype = jnp.dtype(mxu_dtype)
    whh_bytes = H_pad * 4 * H_pad * proj_dtype.itemsize
    t_chunk = _pick_time_chunk(T, b_block, H_pad, proj_dtype.itemsize,
                               jnp.dtype(dtype).itemsize,
                               target=target_chunk, whh_bytes=whh_bytes)
    nt = -(-T // t_chunk)
    T_pad = nt * t_chunk
    unroll = True if t_chunk <= 16 else 8

    wih_t, whh_t, bias = _pad_gate_params(w_ih, w_hh, b_ih, b_hh, H, H_pad)

    # Hoisted input projection (full MXU occupancy, off the sequential path).
    # bf16 MXU inputs with f32 accumulation; pregates streamed to the kernel in bf16.
    x_tb = jnp.transpose(x_btI, (1, 0, 2))                                   # (T,B,I) (cheap: I small)
    pre = jnp.dot(x_tb.reshape(T * B, I).astype(mxu_dtype),
                  wih_t.astype(mxu_dtype),
                  preferred_element_type=jnp.float32) + bias
    pre = pre.reshape(T, B, 4 * H_pad).astype(proj_dtype)
    pregates = jnp.pad(pre, ((0, T_pad - T), (0, B_pad - B), (0, 0)))        # (Tp,Bp,4Hp)

    h0p = jnp.pad(h0.astype(jnp.float32), ((0, B_pad - B), (0, H_pad - H)))
    c0p = jnp.pad(c0.astype(jnp.float32), ((0, B_pad - B), (0, H_pad - H)))
    whh_mxu = whh_t.astype(mxu_dtype)

    kernel = functools.partial(_lstm_kernel, h_pad=H_pad, t_chunk=t_chunk,
                               t_total=T, needs_mask=(T_pad != T), unroll=unroll)

    out_tbh, h_T, c_T = pl.pallas_call(
        kernel,
        out_shape=(
            jax.ShapeDtypeStruct((T_pad, B_pad, H_pad), dtype),
            jax.ShapeDtypeStruct((B_pad, H_pad), jnp.float32),
            jax.ShapeDtypeStruct((B_pad, H_pad), jnp.float32),
        ),
        grid_spec=pltpu.PrefetchScalarGridSpec(
            num_scalar_prefetch=0,
            grid=(nb, nt),                                                   # (batch blocks, time chunks)
            in_specs=[
                pl.BlockSpec((t_chunk, b_block, 4 * H_pad), lambda b, t: (t, b, 0)),  # pregates
                pl.BlockSpec((H_pad, 4 * H_pad), lambda b, t: (0, 0)),                # W_hh^T (resident)
                pl.BlockSpec((b_block, H_pad), lambda b, t: (b, 0)),                  # h0
                pl.BlockSpec((b_block, H_pad), lambda b, t: (b, 0)),                  # c0
            ],
            out_specs=(
                pl.BlockSpec((t_chunk, b_block, H_pad), lambda b, t: (t, b, 0)),      # out
                pl.BlockSpec((b_block, H_pad), lambda b, t: (b, 0)),                  # h_T
                pl.BlockSpec((b_block, H_pad), lambda b, t: (b, 0)),                  # c_T
            ),
            scratch_shapes=[pltpu.VMEM((b_block, H_pad), jnp.float32),               # h carry
                            pltpu.VMEM((b_block, H_pad), jnp.float32)],              # c carry
        ),
        compiler_params=pltpu.CompilerParams(
            dimension_semantics=("parallel", "arbitrary"),   # batch parallel, time sequential
            vmem_limit_bytes=32 * 1024 * 1024,
        ),
    )(pregates, whh_mxu, h0p, c0p)

    # TODO(synk): emit (B_pad, T_pad, H_pad) directly from the kernel to drop this
    # transpose pass; kept as an XLA transpose here for robust Mosaic lowering.
    out = jnp.transpose(out_tbh[:T, :B, :H], (1, 0, 2))                              # (B,T,H)
    return out, h_T[:B, :H], c_T[:B, :H]


# ----------------------------------------------------------------------------
# Thin wrapper mirroring Memory.forward semantics (stateful hidden state,
# 2D-input unsqueeze, lazy init).
# ----------------------------------------------------------------------------
class MemoryPallas:
    # TODO(synk): GRU variant ('gru') and num_layers > 1 are not implemented
    #             (single-layer LSTM only).
    def __init__(self, input_size, type='lstm', num_layers=1, hidden_size=256,
                 seed=1, mxu_dtype=jnp.bfloat16, batch_blocks=1):
        assert type.lower() == 'lstm', "only the LSTM variant is implemented"
        assert num_layers == 1, "single-layer LSTM implemented"
        self.input_size = input_size
        self.hidden_size = hidden_size
        self.num_layers = num_layers
        self.mxu_dtype = mxu_dtype
        self.batch_blocks = batch_blocks
        # Deterministic PyTorch-style init: U(-k, k), k = 1/sqrt(H)
        k = 1.0 / jnp.sqrt(jnp.float32(hidden_size))
        keys = jax.random.split(jax.random.PRNGKey(seed), 4)
        H, I = hidden_size, input_size
        self.w_ih = jax.random.uniform(keys[0], (4 * H, I), jnp.float32, -k, k)
        self.w_hh = jax.random.uniform(keys[1], (4 * H, H), jnp.float32, -k, k)
        self.b_ih = jax.random.uniform(keys[2], (4 * H,), jnp.float32, -k, k)
        self.b_hh = jax.random.uniform(keys[3], (4 * H,), jnp.float32, -k, k)
        self.hidden_states = None

    def init_hidden_states(self, batch_size):
        z = jnp.zeros((self.num_layers, batch_size, self.hidden_size), jnp.float32)
        self.hidden_states = (z, z)

    def reset(self, dones=None):
        # NOTE: boolean-mask indexing only works eagerly (not under jit).
        if self.hidden_states is None:
            return
        h, c = self.hidden_states
        if dones is None:
            self.hidden_states = (jnp.zeros_like(h), jnp.zeros_like(c))
        else:
            self.hidden_states = (h.at[..., dones, :].set(0.0),
                                  c.at[..., dones, :].set(0.0))

    def forward(self, x, hidden_states=None):
        bz = x.shape[0]
        self.hidden_states = hidden_states if hidden_states is not None else self.hidden_states
        if self.hidden_states is None or self.hidden_states[0].shape[1] != bz:
            print("Initializing hidden states")
            self.init_hidden_states(bz)
        if x.ndim == 2:
            x = x[:, None, :]
        h0, c0 = self.hidden_states
        out, h_T, c_T = lstm_pallas(x, self.w_ih, self.w_hh, self.b_ih, self.b_hh,
                                    h0[0], c0[0], mxu_dtype=self.mxu_dtype,
                                    batch_blocks=self.batch_blocks)
        self.hidden_states = (h_T[None], c_T[None])
        return out


# ----------------------------------------------------------------------------
# Pure-JAX reference LSTM (correctness check only).
# ----------------------------------------------------------------------------
def lstm_ref(x, w_ih, w_hh, b_ih, b_hh, h0, c0):
    H = w_hh.shape[1]

    def step(carry, x_t):
        h, c = carry
        gates = x_t @ w_ih.T + h @ w_hh.T + b_ih + b_hh
        i = jax.nn.sigmoid(gates[:, :H])
        f = jax.nn.sigmoid(gates[:, H:2 * H])
        g = jnp.tanh(gates[:, 2 * H:3 * H])
        o = jax.nn.sigmoid(gates[:, 3 * H:])
        c = f * c + i * g
        h = o * jnp.tanh(c)
        return (h, c), h

    xs = jnp.transpose(x, (1, 0, 2))
    (h_T, c_T), ys = jax.lax.scan(step, (h0, c0), xs)
    return jnp.transpose(ys, (1, 0, 2)), h_T, c_T


if __name__ == "__main__":
    B, T, I, H = 2, 8, 16, 32

    x = jax.random.normal(jax.random.PRNGKey(0), (B, T, I), jnp.float32)
    x_next = jax.random.normal(jax.random.PRNGKey(2), (B, T, I), jnp.float32)
    zeros_state = jnp.zeros((B, H), jnp.float32)

    # ---- f32 MXU path: tight tolerance, including the stateful (h_T, c_T) carry.
    mem32 = MemoryPallas(input_size=I, hidden_size=H, mxu_dtype=jnp.float32)
    out1 = jax.block_until_ready(mem32.forward(x))
    assert out1.shape == (B, T, H), out1.shape
    ref1, h_ref, c_ref = lstm_ref(x, mem32.w_ih, mem32.w_hh, mem32.b_ih, mem32.b_hh,
                                  zeros_state, zeros_state)
    assert jnp.allclose(out1, ref1, atol=1e-4, rtol=1e-4), \
        float(jnp.max(jnp.abs(out1 - ref1)))
    assert jnp.allclose(mem32.hidden_states[0][0], h_ref, atol=1e-4, rtol=1e-4)
    assert jnp.allclose(mem32.hidden_states[1][0], c_ref, atol=1e-4, rtol=1e-4)

    out2 = jax.block_until_ready(mem32.forward(x_next))   # uses carried (h_T, c_T)
    ref2, _, _ = lstm_ref(x_next, mem32.w_ih, mem32.w_hh, mem32.b_ih, mem32.b_hh,
                          h_ref, c_ref)
    assert jnp.allclose(out2, ref2, atol=1e-4, rtol=1e-4), \
        float(jnp.max(jnp.abs(out2 - ref2)))

    # ---- Tail-predication path: chunk does not divide T (padded timesteps masked).
    out_t, hT_t, cT_t = jax.block_until_ready(
        lstm_pallas(x, mem32.w_ih, mem32.w_hh, mem32.b_ih, mem32.b_hh,
                    zeros_state, zeros_state, mxu_dtype=jnp.float32, target_chunk=3))
    assert jnp.allclose(out_t, ref1, atol=1e-4, rtol=1e-4), \
        float(jnp.max(jnp.abs(out_t - ref1)))
    assert jnp.allclose(hT_t, h_ref, atol=1e-4, rtol=1e-4)
    assert jnp.allclose(cT_t, c_ref, atol=1e-4, rtol=1e-4)

    # ---- bf16 MXU path (default, MXU-native): looser tolerance (bf16 pregates).
    mem_bf16 = MemoryPallas(input_size=I, hidden_size=H)   # same seed -> same weights
    out_bf = jax.block_until_ready(mem_bf16.forward(x))
    assert out_bf.shape == (B, T, H), out_bf.shape
    assert jnp.allclose(out_bf, ref1, atol=5e-2, rtol=5e-2), \
        float(jnp.max(jnp.abs(out_bf - ref1)))

    # ---- 2D-input path (unsqueeze to seq=1), fresh zero state.
    x2 = jax.random.normal(jax.random.PRNGKey(1), (B, I), jnp.float32)
    out3 = jax.block_until_ready(
        mem_bf16.forward(x2, hidden_states=(jnp.zeros((1, B, H), jnp.float32),
                                            jnp.zeros((1, B, H), jnp.float32))))
    assert out3.shape == (B, 1, H), out3.shape

    print("KERNEL_OK")
</pallas_src>

<mosaic_0001>
module attributes {stable_mosaic.version = 11 : i64} {
  func.func @_lstm_kernel(%arg0: i32, %arg1: i32, %arg2: memref<8x8x512xf32, #tpu.memory_space<vmem>>, %arg3: memref<128x512xf32, #tpu.memory_space<vmem>>, %arg4: memref<8x128xf32, #tpu.memory_space<vmem>>, %arg5: memref<8x128xf32, #tpu.memory_space<vmem>>, %arg6: memref<8x8x128xf32, #tpu.memory_space<vmem>>, %arg7: memref<8x128xf32, #tpu.memory_space<vmem>>, %arg8: memref<8x128xf32, #tpu.memory_space<vmem>>, %arg9: memref<8x128xf32, #tpu.memory_space<vmem>>, %arg10: memref<8x128xf32, #tpu.memory_space<vmem>>) attributes {dimension_semantics = [#tpu.dimension_semantics<parallel>, #tpu.dimension_semantics<arbitrary>], iteration_bounds = array<i64: 1, 1>, scalar_prefetch = 0 : i64, scratch_operands = 2 : i64, tpu.core_type = #tpu.core_type<tc>, window_params = [{transform_indices = @transform_0, window_bounds = array<i64: 8, 8, 512>}, {pipeline_mode = #tpu.pipeline_mode<synchronous>, transform_indices = @transform_1, window_bounds = array<i64: 128, 512>}, {transform_indices = @transform_2, window_bounds = array<i64: 8, 128>}, {transform_indices = @transform_3, window_bounds = array<i64: 8, 128>}, {transform_indices = @transform_4, window_bounds = array<i64: 8, 8, 128>}, {transform_indices = @transform_5, window_bounds = array<i64: 8, 128>}, {transform_indices = @transform_6, window_bounds = array<i64: 8, 128>}]} {
    %c0_i32 = arith.constant 0 : i32
    %0 = arith.cmpi eq, %arg1, %c0_i32 : i32
    %1 = arith.extui %0 : i1 to i32
    %c0_i32_0 = arith.constant 0 : i32
    %2 = arith.cmpi ne, %1, %c0_i32_0 : i32
    scf.if %2 {
      %c0_138 = arith.constant 0 : index
      %c0_139 = arith.constant 0 : index
      %338 = vector.load %arg4[%c0_138, %c0_139] : memref<8x128xf32, #tpu.memory_space<vmem>>, vector<8x128xf32>
      %c0_140 = arith.constant 0 : index
      %c0_141 = arith.constant 0 : index
      %339 = vector.load %arg9[%c0_140, %c0_141] : memref<8x128xf32, #tpu.memory_space<vmem>>, vector<8x128xf32>
      tpu.vector_store %arg9[%c0_140, %c0_141], %338 {strides = array<i32>} : memref<8x128xf32, #tpu.memory_space<vmem>>, vector<8x128xf32>,
      %c0_142 = arith.constant 0 : index
      %c0_143 = arith.constant 0 : index
      %340 = vector.load %arg5[%c0_142, %c0_143] : memref<8x128xf32, #tpu.memory_space<vmem>>, vector<8x128xf32>
      %c0_144 = arith.constant 0 : index
      %c0_145 = arith.constant 0 : index
      %341 = vector.load %arg10[%c0_144, %c0_145] : memref<8x128xf32, #tpu.memory_space<vmem>>, vector<8x128xf32>
      tpu.vector_store %arg10[%c0_144, %c0_145], %340 {strides = array<i32>} : memref<8x128xf32, #tpu.memory_space<vmem>>, vector<8x128xf32>,
    } else {
    }
    %c0 = arith.constant 0 : index
    %c0_1 = arith.constant 0 : index
    %3 = vector.load %arg9[%c0, %c0_1] : memref<8x128xf32, #tpu.memory_space<vmem>>, vector<8x128xf32>
    %c0_2 = arith.constant 0 : index
    %c0_3 = arith.constant 0 : index
    %4 = vector.load %arg10[%c0_2, %c0_3] : memref<8x128xf32, #tpu.memory_space<vmem>>, vector<8x128xf32>
    %c0_i32_4 = arith.constant 0 : i32
    %5 = arith.index_cast %c0_i32_4 : i32 to index
    %c0_5 = arith.constant 0 : index
    %c0_6 = arith.constant 0 : index
    %6 = vector.load %arg2[%5, %c0_5, %c0_6] : memref<8x8x512xf32, #tpu.memory_space<vmem>>, vector<1x8x512xf32>
    %7 = vector.shape_cast %6 : vector<1x8x512xf32> to vector<8x512xf32>
    %c0_7 = arith.constant 0 : index
    %c0_8 = arith.constant 0 : index
    %8 = vector.load %arg3[%c0_7, %c0_8] : memref<128x512xf32, #tpu.memory_space<vmem>>, vector<128x512xf32>
    %cst = arith.constant dense<0.000000e+00> : vector<8x512xf32>
    %9 = tpu.matmul %3, %8, %cst {dimension_numbers = #tpu.dot_dimension_numbers<[1], [0], [0], [1], [0, 0, 1, 1], [], []>} : vector<8x128xf32>, vector<128x512xf32>, vector<8x512xf32> -> vector<8x512xf32>
    %10 = arith.addf %7, %9 : vector<8x512xf32>
    %11 = vector.extract_strided_slice %10 {offsets = [0, 0], sizes = [8, 128], strides = [1, 1]} : vector<8x512xf32> to vector<8x128xf32>
    %cst_9 = arith.constant 5.000000e-01 : f32
    %12 = vector.broadcast %cst_9 : f32 to vector<8x128xf32>
    %13 = arith.mulf %12, %11 : vector<8x128xf32>
    %14 = math.tanh %13 : vector<8x128xf32>
    %cst_10 = arith.constant 1.000000e+00 : f32
    %15 = vector.broadcast %cst_10 : f32 to vector<8x128xf32>
    %16 = arith.addf %14, %15 : vector<8x128xf32>
    %cst_11 = arith.constant 5.000000e-01 : f32
    %17 = vector.broadcast %cst_11 : f32 to vector<8x128xf32>
    %18 = arith.mulf %17, %16 : vector<8x128xf32>
    %19 = vector.extract_strided_slice %10 {offsets = [0, 128], sizes = [8, 128], strides = [1, 1]} : vector<8x512xf32> to vector<8x128xf32>
    %cst_12 = arith.constant 5.000000e-01 : f32
    %20 = vector.broadcast %cst_12 : f32 to vector<8x128xf32>
    %21 = arith.mulf %20, %19 : vector<8x128xf32>
    %22 = math.tanh %21 : vector<8x128xf32>
    %cst_13 = arith.constant 1.000000e+00 : f32
    %23 = vector.broadcast %cst_13 : f32 to vector<8x128xf32>
    %24 = arith.addf %22, %23 : vector<8x128xf32>
    %cst_14 = arith.constant 5.000000e-01 : f32
    %25 = vector.broadcast %cst_14 : f32 to vector<8x128xf32>
    %26 = arith.mulf %25, %24 : vector<8x128xf32>
    %27 = vector.extract_strided_slice %10 {offsets = [0, 256], sizes = [8, 128], strides = [1, 1]} : vector<8x512xf32> to vector<8x128xf32>
    %28 = math.tanh %27 : vector<8x128xf32>
    %29 = vector.extract_strided_slice %10 {offsets = [0, 384], sizes = [8, 128], strides = [1, 1]} : vector<8x512xf32> to vector<8x128xf32>
    %cst_15 = arith.constant 5.000000e-01 : f32
    %30 = vector.broadcast %cst_15 : f32 to vector<8x128xf32>
    %31 = arith.mulf %30, %29 : vector<8x128xf32>
    %32 = math.tanh %31 : vector<8x128xf32>
    %cst_16 = arith.constant 1.000000e+00 : f32
    %33 = vector.broadcast %cst_16 : f32 to vector<8x128xf32>
    %34 = arith.addf %32, %33 : vector<8x128xf32>
    %cst_17 = arith.constant 5.000000e-01 : f32
    %35 = vector.broadcast %cst_17 : f32 to vector<8x128xf32>
    %36 = arith.mulf %35, %34 : vector<8x128xf32>
    %37 = arith.mulf %26, %4 : vector<8x128xf32>
    %38 = arith.mulf %18, %28 : vector<8x128xf32>
    %39 = arith.addf %37, %38 : vector<8x128xf32>
    %40 = math.tanh %39 : vector<8x128xf32>
    %41 = arith.mulf %36, %40 : vector<8x128xf32>
    %42 = arith.index_cast %c0_i32_4 : i32 to index
    %c0_18 = arith.constant 0 : index
    %c0_19 = arith.constant 0 : index
    %43 = vector.load %arg6[%42, %c0_18, %c0_19] : memref<8x8x128xf32, #tpu.memory_space<vmem>>, vector<1x8x128xf32>
    %44 = vector.shape_cast %43 : vector<1x8x128xf32> to vector<8x128xf32>
    %45 = vector.shape_cast %41 : vector<8x128xf32> to vector<1x8x128xf32>
    tpu.vector_store %arg6[%42, %c0_18, %c0_19], %45 {strides = array<i32>} : memref<8x8x128xf32, #tpu.memory_space<vmem>>, vector<1x8x128xf32>,
    %c1_i32 = arith.constant 1 : i32
    %46 = arith.index_cast %c1_i32 : i32 to index
    %c0_20 = arith.constant 0 : index
    %c0_21 = arith.constant 0 : index
    %47 = vector.load %arg2[%46, %c0_20, %c0_21] : memref<8x8x512xf32, #tpu.memory_space<vmem>>, vector<1x8x512xf32>
    %48 = vector.shape_cast %47 : vector<1x8x512xf32> to vector<8x512xf32>
    %c0_22 = arith.constant 0 : index
    %c0_23 = arith.constant 0 : index
    %49 = vector.load %arg3[%c0_22, %c0_23] : memref<128x512xf32, #tpu.memory_space<vmem>>, vector<128x512xf32>
    %cst_24 = arith.constant dense<0.000000e+00> : vector<8x512xf32>
    %50 = tpu.matmul %41, %49, %cst_24 {dimension_numbers = #tpu.dot_dimension_numbers<[1], [0], [0], [1], [0, 0, 1, 1], [], []>} : vector<8x128xf32>, vector<128x512xf32>, vector<8x512xf32> -> vector<8x512xf32>
    %51 = arith.addf %48, %50 : vector<8x512xf32>
    %52 = vector.extract_strided_slice %51 {offsets = [0, 0], sizes = [8, 128], strides = [1, 1]} : vector<8x512xf32> to vector<8x128xf32>
    %cst_25 = arith.constant 5.000000e-01 : f32
    %53 = vector.broadcast %cst_25 : f32 to vector<8x128xf32>
    %54 = arith.mulf %53, %52 : vector<8x128xf32>
    %55 = math.tanh %54 : vector<8x128xf32>
    %cst_26 = arith.constant 1.000000e+00 : f32
    %56 = vector.broadcast %cst_26 : f32 to vector<8x128xf32>
    %57 = arith.addf %55, %56 : vector<8x128xf32>
    %cst_27 = arith.constant 5.000000e-01 : f32
    %58 = vector.broadcast %cst_27 : f32 to vector<8x128xf32>
    %59 = arith.mulf %58, %57 : vector<8x128xf32>
    %60 = vector.extract_strided_slice %51 {offsets = [0, 128], sizes = [8, 128], strides = [1, 1]} : vector<8x512xf32> to vector<8x128xf32>
    %cst_28 = arith.constant 5.000000e-01 : f32
    %61 = vector.broadcast %cst_28 : f32 to vector<8x128xf32>
    %62 = arith.mulf %61, %60 : vector<8x128xf32>
    %63 = math.tanh %62 : vector<8x128xf32>
    %cst_29 = arith.constant 1.000000e+00 : f32
    %64 = vector.broadcast %cst_29 : f32 to vector<8x128xf32>
    %65 = arith.addf %63, %64 : vector<8x128xf32>
    %cst_30 = arith.constant 5.000000e-01 : f32
    %66 = vector.broadcast %cst_30 : f32 to vector<8x128xf32>
    %67 = arith.mulf %66, %65 : vector<8x128xf32>
    %68 = vector.extract_strided_slice %51 {offsets = [0, 256], sizes = [8, 128], strides = [1, 1]} : vector<8x512xf32> to vector<8x128xf32>
    %69 = math.tanh %68 : vector<8x128xf32>
    %70 = vector.extract_strided_slice %51 {offsets = [0, 384], sizes = [8, 128], strides = [1, 1]} : vector<8x512xf32> to vector<8x128xf32>
    %cst_31 = arith.constant 5.000000e-01 : f32
    %71 = vector.broadcast %cst_31 : f32 to vector<8x128xf32>
    %72 = arith.mulf %71, %70 : vector<8x128xf32>
    %73 = math.tanh %72 : vector<8x128xf32>
    %cst_32 = arith.constant 1.000000e+00 : f32
    %74 = vector.broadcast %cst_32 : f32 to vector<8x128xf32>
    %75 = arith.addf %73, %74 : vector<8x128xf32>
    %cst_33 = arith.constant 5.000000e-01 : f32
    %76 = vector.broadcast %cst_33 : f32 to vector<8x128xf32>
    %77 = arith.mulf %76, %75 : vector<8x128xf32>
    %78 = arith.mulf %67, %39 : vector<8x128xf32>
    %79 = arith.mulf %59, %69 : vector<8x128xf32>
    %80 = arith.addf %78, %79 : vector<8x128xf32>
    %81 = math.tanh %80 : vector<8x128xf32>
    %82 = arith.mulf %77, %81 : vector<8x128xf32>
    %83 = arith.index_cast %c1_i32 : i32 to index
    %c0_34 = arith.constant 0 : index
    %c0_35 = arith.constant 0 : index
    %84 = vector.load %arg6[%83, %c0_34, %c0_35] : memref<8x8x128xf32, #tpu.memory_space<vmem>>, vector<1x8x128xf32>
    %85 = vector.shape_cast %84 : vector<1x8x128xf32> to vector<8x128xf32>
    %86 = vector.shape_cast %82 : vector<8x128xf32> to vector<1x8x128xf32>
    tpu.vector_store %arg6[%83, %c0_34, %c0_35], %86 {strides = array<i32>} : memref<8x8x128xf32, #tpu.memory_space<vmem>>, vector<1x8x128xf32>,
    %c2_i32 = arith.constant 2 : i32
    %87 = arith.index_cast %c2_i32 : i32 to index
    %c0_36 = arith.constant 0 : index
    %c0_37 = arith.constant 0 : index
    %88 = vector.load %arg2[%87, %c0_36, %c0_37] : memref<8x8x512xf32, #tpu.memory_space<vmem>>, vector<1x8x512xf32>
    %89 = vector.shape_cast %88 : vector<1x8x512xf32> to vector<8x512xf32>
    %c0_38 = arith.constant 0 : index
    %c0_39 = arith.constant 0 : index
    %90 = vector.load %arg3[%c0_38, %c0_39] : memref<128x512xf32, #tpu.memory_space<vmem>>, vector<128x512xf32>
    %cst_40 = arith.constant dense<0.000000e+00> : vector<8x512xf32>
    %91 = tpu.matmul %82, %90, %cst_40 {dimension_numbers = #tpu.dot_dimension_numbers<[1], [0], [0], [1], [0, 0, 1, 1], [], []>} : vector<8x128xf32>, vector<128x512xf32>, vector<8x512xf32> -> vector<8x512xf32>
    %92 = arith.addf %89, %91 : vector<8x512xf32>
    %93 = vector.extract_strided_slice %92 {offsets = [0, 0], sizes = [8, 128], strides = [1, 1]} : vector<8x512xf32> to vector<8x128xf32>
    %cst_41 = arith.constant 5.000000e-01 : f32
    %94 = vector.broadcast %cst_41 : f32 to vector<8x128xf32>
    %95 = arith.mulf %94, %93 : vector<8x128xf32>
    %96 = math.tanh %95 : vector<8x128xf32>
    %cst_42 = arith.constant 1.000000e+00 : f32
    %97 = vector.broadcast %cst_42 : f32 to vector<8x128xf32>
    %98 = arith.addf %96, %97 : vector<8x128xf32>
    %cst_43 = arith.constant 5.000000e-01 : f32
    %99 = vector.broadcast %cst_43 : f32 to vector<8x128xf32>
    %100 = arith.mulf %99, %98 : vector<8x128xf32>
    %101 = vector.extract_strided_slice %92 {offsets = [0, 128], sizes = [8, 128], strides = [1, 1]} : vector<8x512xf32> to vector<8x128xf32>
    %cst_44 = arith.constant 5.000000e-01 : f32
    %102 = vector.broadcast %cst_44 : f32 to vector<8x128xf32>
    %103 = arith.mulf %102, %101 : vector<8x128xf32>
    %104 = math.tanh %103 : vector<8x128xf32>
    %cst_45 = arith.constant 1.000000e+00 : f32
    %105 = vector.broadcast %cst_45 : f32 to vector<8x128xf32>
    %106 = arith.addf %104, %105 : vector<8x128xf32>
    %cst_46 = arith.constant 5.000000e-01 : f32
    %107 = vector.broadcast %cst_46 : f32 to vector<8x128xf32>
    %108 = arith.mulf %107, %106 : vector<8x128xf32>
    %109 = vector.extract_strided_slice %92 {offsets = [0, 256], sizes = [8, 128], strides = [1, 1]} : vector<8x512xf32> to vector<8x128xf32>
    %110 = math.tanh %109 : vector<8x128xf32>
    %111 = vector.extract_strided_slice %92 {offsets = [0, 384], sizes = [8, 128], strides = [1, 1]} : vector<8x512xf32> to vector<8x128xf32>
    %cst_47 = arith.constant 5.000000e-01 : f32
    %112 = vector.broadcast %cst_47 : f32 to vector<8x128xf32>
    %113 = arith.mulf %112, %111 : vector<8x128xf32>
    %114 = math.tanh %113 : vector<8x128xf32>
    %cst_48 = arith.constant 1.000000e+00 : f32
    %115 = vector.broadcast %cst_48 : f32 to vector<8x128xf32>
    %116 = arith.addf %114, %115 : vector<8x128xf32>
    %cst_49 = arith.constant 5.000000e-01 : f32
    %117 = vector.broadcast %cst_49 : f32 to vector<8x128xf32>
    %118 = arith.mulf %117, %116 : vector<8x128xf32>
    %119 = arith.mulf %108, %80 : vector<8x128xf32>
    %120 = arith.mulf %100, %110 : vector<8x128xf32>
    %121 = arith.addf %119, %120 : vector<8x128xf32>
    %122 = math.tanh %121 : vector<8x128xf32>
    %123 = arith.mulf %118, %122 : vector<8x128xf32>
    %124 = arith.index_cast %c2_i32 : i32 to index
    %c0_50 = arith.constant 0 : index
    %c0_51 = arith.constant 0 : index
    %125 = vector.load %arg6[%124, %c0_50, %c0_51] : memref<8x8x128xf32, #tpu.memory_space<vmem>>, vector<1x8x128xf32>
    %126 = vector.shape_cast %125 : vector<1x8x128xf32> to vector<8x128xf32>
    %127 = vector.shape_cast %123 : vector<8x128xf32> to vector<1x8x128xf32>
    tpu.vector_store %arg6[%124, %c0_50, %c0_51], %127 {strides = array<i32>} : memref<8x8x128xf32, #tpu.memory_space<vmem>>, vector<1x8x128xf32>,
    %c3_i32 = arith.constant 3 : i32
    %128 = arith.index_cast %c3_i32 : i32 to index
    %c0_52 = arith.constant 0 : index
    %c0_53 = arith.constant 0 : index
    %129 = vector.load %arg2[%128, %c0_52, %c0_53] : memref<8x8x512xf32, #tpu.memory_space<vmem>>, vector<1x8x512xf32>
    %130 = vector.shape_cast %129 : vector<1x8x512xf32> to vector<8x512xf32>
    %c0_54 = arith.constant 0 : index
    %c0_55 = arith.constant 0 : index
    %131 = vector.load %arg3[%c0_54, %c0_55] : memref<128x512xf32, #tpu.memory_space<vmem>>, vector<128x512xf32>
    %cst_56 = arith.constant dense<0.000000e+00> : vector<8x512xf32>
    %132 = tpu.matmul %123, %131, %cst_56 {dimension_numbers = #tpu.dot_dimension_numbers<[1], [0], [0], [1], [0, 0, 1, 1], [], []>} : vector<8x128xf32>, vector<128x512xf32>, vector<8x512xf32> -> vector<8x512xf32>
    %133 = arith.addf %130, %132 : vector<8x512xf32>
    %134 = vector.extract_strided_slice %133 {offsets = [0, 0], sizes = [8, 128], strides = [1, 1]} : vector<8x512xf32> to vector<8x128xf32>
    %cst_57 = arith.constant 5.000000e-01 : f32
    %135 = vector.broadcast %cst_57 : f32 to vector<8x128xf32>
    %136 = arith.mulf %135, %134 : vector<8x128xf32>
    %137 = math.tanh %136 : vector<8x128xf32>
    %cst_58 = arith.constant 1.000000e+00 : f32
    %138 = vector.broadcast %cst_58 : f32 to vector<8x128xf32>
    %139 = arith.addf %137, %138 : vector<8x128xf32>
    %cst_59 = arith.constant 5.000000e-01 : f32
    %140 = vector.broadcast %cst_59 : f32 to vector<8x128xf32>
    %141 = arith.mulf %140, %139 : vector<8x128xf32>
    %142 = vector.extract_strided_slice %133 {offsets = [0, 128], sizes = [8, 128], strides = [1, 1]} : vector<8x512xf32> to vector<8x128xf32>
    %cst_60 = arith.constant 5.000000e-01 : f32
    %143 = vector.broadcast %cst_60 : f32 to vector<8x128xf32>
    %144 = arith.mulf %143, %142 : vector<8x128xf32>
    %145 = math.tanh %144 : vector<8x128xf32>
    %cst_61 = arith.constant 1.000000e+00 : f32
    %146 = vector.broadcast %cst_61 : f32 to vector<8x128xf32>
    %147 = arith.addf %145, %146 : vector<8x128xf32>
    %cst_62 = arith.constant 5.000000e-01 : f32
    %148 = vector.broadcast %cst_62 : f32 to vector<8x128xf32>
    %149 = arith.mulf %148, %147 : vector<8x128xf32>
    %150 = vector.extract_strided_slice %133 {offsets = [0, 256], sizes = [8, 128], strides = [1, 1]} : vector<8x512xf32> to vector<8x128xf32>
    %151 = math.tanh %150 : vector<8x128xf32>
    %152 = vector.extract_strided_slice %133 {offsets = [0, 384], sizes = [8, 128], strides = [1, 1]} : vector<8x512xf32> to vector<8x128xf32>
    %cst_63 = arith.constant 5.000000e-01 : f32
    %153 = vector.broadcast %cst_63 : f32 to vector<8x128xf32>
    %154 = arith.mulf %153, %152 : vector<8x128xf32>
    %155 = math.tanh %154 : vector<8x128xf32>
    %cst_64 = arith.constant 1.000000e+00 : f32
    %156 = vector.broadcast %cst_64 : f32 to vector<8x128xf32>
    %157 = arith.addf %155, %156 : vector<8x128xf32>
    %cst_65 = arith.constant 5.000000e-01 : f32
    %158 = vector.broadcast %cst_65 : f32 to vector<8x128xf32>
    %159 = arith.mulf %158, %157 : vector<8x128xf32>
    %160 = arith.mulf %149, %121 : vector<8x128xf32>
    %161 = arith.mulf %141, %151 : vector<8x128xf32>
    %162 = arith.addf %160, %161 : vector<8x128xf32>
    %163 = math.tanh %162 : vector<8x128xf32>
    %164 = arith.mulf %159, %163 : vector<8x128xf32>
    %165 = arith.index_cast %c3_i32 : i32 to index
    %c0_66 = arith.constant 0 : index
    %c0_67 = arith.constant 0 : index
    %166 = vector.load %arg6[%165, %c0_66, %c0_67] : memref<8x8x128xf32, #tpu.memory_space<vmem>>, vector<1x8x128xf32>
    %167 = vector.shape_cast %166 : vector<1x8x128xf32> to vector<8x128xf32>
    %168 = vector.shape_cast %164 : vector<8x128xf32> to vector<1x8x128xf32>
    tpu.vector_store %arg6[%165, %c0_66, %c0_67], %168 {strides = array<i32>} : memref<8x8x128xf32, #tpu.memory_space<vmem>>, vector<1x8x128xf32>,
    %c4_i32 = arith.constant 4 : i32
    %169 = arith.index_cast %c4_i32 : i32 to index
    %c0_68 = arith.constant 0 : index
    %c0_69 = arith.constant 0 : index
    %170 = vector.load %arg2[%169, %c0_68, %c0_69] : memref<8x8x512xf32, #tpu.memory_space<vmem>>, vector<1x8x512xf32>
    %171 = vector.shape_cast %170 : vector<1x8x512xf32> to vector<8x512xf32>
    %c0_70 = arith.constant 0 : index
    %c0_71 = arith.constant 0 : index
    %172 = vector.load %arg3[%c0_70, %c0_71] : memref<128x512xf32, #tpu.memory_space<vmem>>, vector<128x512xf32>
    %cst_72 = arith.constant dense<0.000000e+00> : vector<8x512xf32>
    %173 = tpu.matmul %164, %172, %cst_72 {dimension_numbers = #tpu.dot_dimension_numbers<[1], [0], [0], [1], [0, 0, 1, 1], [], []>} : vector<8x128xf32>, vector<128x512xf32>, vector<8x512xf32> -> vector<8x512xf32>
    %174 = arith.addf %171, %173 : vector<8x512xf32>
    %175 = vector.extract_strided_slice %174 {offsets = [0, 0], sizes = [8, 128], strides = [1, 1]} : vector<8x512xf32> to vector<8x128xf32>
    %cst_73 = arith.constant 5.000000e-01 : f32
    %176 = vector.broadcast %cst_73 : f32 to vector<8x128xf32>
    %177 = arith.mulf %176, %175 : vector<8x128xf32>
    %178 = math.tanh %177 : vector<8x128xf32>
    %cst_74 = arith.constant 1.000000e+00 : f32
    %179 = vector.broadcast %cst_74 : f32 to vector<8x128xf32>
    %180 = arith.addf %178, %179 : vector<8x128xf32>
    %cst_75 = arith.constant 5.000000e-01 : f32
    %181 = vector.broadcast %cst_75 : f32 to vector<8x128xf32>
    %182 = arith.mulf %181, %180 : vector<8x128xf32>
    %183 = vector.extract_strided_slice %174 {offsets = [0, 128], sizes = [8, 128], strides = [1, 1]} : vector<8x512xf32> to vector<8x128xf32>
    %cst_76 = arith.constant 5.000000e-01 : f32
    %184 = vector.broadcast %cst_76 : f32 to vector<8x128xf32>
    %185 = arith.mulf %184, %183 : vector<8x128xf32>
    %186 = math.tanh %185 : vector<8x128xf32>
    %cst_77 = arith.constant 1.000000e+00 : f32
    %187 = vector.broadcast %cst_77 : f32 to vector<8x128xf32>
    %188 = arith.addf %186, %187 : vector<8x128xf32>
    %cst_78 = arith.constant 5.000000e-01 : f32
    %189 = vector.broadcast %cst_78 : f32 to vector<8x128xf32>
    %190 = arith.mulf %189, %188 : vector<8x128xf32>
    %191 = vector.extract_strided_slice %174 {offsets = [0, 256], sizes = [8, 128], strides = [1, 1]} : vector<8x512xf32> to vector<8x128xf32>
    %192 = math.tanh %191 : vector<8x128xf32>
    %193 = vector.extract_strided_slice %174 {offsets = [0, 384], sizes = [8, 128], strides = [1, 1]} : vector<8x512xf32> to vector<8x128xf32>
    %cst_79 = arith.constant 5.000000e-01 : f32
    %194 = vector.broadcast %cst_79 : f32 to vector<8x128xf32>
    %195 = arith.mulf %194, %193 : vector<8x128xf32>
    %196 = math.tanh %195 : vector<8x128xf32>
    %cst_80 = arith.constant 1.000000e+00 : f32
    %197 = vector.broadcast %cst_80 : f32 to vector<8x128xf32>
    %198 = arith.addf %196, %197 : vector<8x128xf32>
    %cst_81 = arith.constant 5.000000e-01 : f32
    %199 = vector.broadcast %cst_81 : f32 to vector<8x128xf32>
    %200 = arith.mulf %199, %198 : vector<8x128xf32>
    %201 = arith.mulf %190, %162 : vector<8x128xf32>
    %202 = arith.mulf %182, %192 : vector<8x128xf32>
    %203 = arith.addf %201, %202 : vector<8x128xf32>
    %204 = math.tanh %203 : vector<8x128xf32>
    %205 = arith.mulf %200, %204 : vector<8x128xf32>
    %206 = arith.index_cast %c4_i32 : i32 to index
    %c0_82 = arith.constant 0 : index
    %c0_83 = arith.constant 0 : index
    %207 = vector.load %arg6[%206, %c0_82, %c0_83] : memref<8x8x128xf32, #tpu.memory_space<vmem>>, vector<1x8x128xf32>
    %208 = vector.shape_cast %207 : vector<1x8x128xf32> to vector<8x128xf32>
    %209 = vector.shape_cast %205 : vector<8x128xf32> to vector<1x8x128xf32>
    tpu.vector_store %arg6[%206, %c0_82, %c0_83], %209 {strides = array<i32>} : memref<8x8x128xf32, #tpu.memory_space<vmem>>, vector<1x8x128xf32>,
    %c5_i32 = arith.constant 5 : i32
    %210 = arith.index_cast %c5_i32 : i32 to index
    %c0_84 = arith.constant 0 : index
    %c0_85 = arith.constant 0 : index
    %211 = vector.load %arg2[%210, %c0_84, %c0_85] : memref<8x8x512xf32, #tpu.memory_space<vmem>>, vector<1x8x512xf32>
    %212 = vector.shape_cast %211 : vector<1x8x512xf32> to vector<8x512xf32>
    %c0_86 = arith.constant 0 : index
    %c0_87 = arith.constant 0 : index
    %213 = vector.load %arg3[%c0_86, %c0_87] : memref<128x512xf32, #tpu.memory_space<vmem>>, vector<128x512xf32>
    %cst_88 = arith.constant dense<0.000000e+00> : vector<8x512xf32>
    %214 = tpu.matmul %205, %213, %cst_88 {dimension_numbers = #tpu.dot_dimension_numbers<[1], [0], [0], [1], [0, 0, 1, 1], [], []>} : vector<8x128xf32>, vector<128x512xf32>, vector<8x512xf32> -> vector<8x512xf32>
    %215 = arith.addf %212, %214 : vector<8x512xf32>
    %216 = vector.extract_strided_slice %215 {offsets = [0, 0], sizes = [8, 128], strides = [1, 1]} : vector<8x512xf32> to vector<8x128xf32>
    %cst_89 = arith.constant 5.000000e-01 : f32
    %217 = vector.broadcast %cst_89 : f32 to vector<8x128xf32>
    %218 = arith.mulf %217, %216 : vector<8x128xf32>
    %219 = math.tanh %218 : vector<8x128xf32>
    %cst_90 = arith.constant 1.000000e+00 : f32
    %220 = vector.broadcast %cst_90 : f32 to vector<8x128xf32>
    %221 = arith.addf %219, %220 : vector<8x128xf32>
    %cst_91 = arith.constant 5.000000e-01 : f32
    %222 = vector.broadcast %cst_91 : f32 to vector<8x128xf32>
    %223 = arith.mulf %222, %221 : vector<8x128xf32>
    %224 = vector.extract_strided_slice %215 {offsets = [0, 128], sizes = [8, 128], strides = [1, 1]} : vector<8x512xf32> to vector<8x128xf32>
    %cst_92 = arith.constant 5.000000e-01 : f32
    %225 = vector.broadcast %cst_92 : f32 to vector<8x128xf32>
    %226 = arith.mulf %225, %224 : vector<8x128xf32>
    %227 = math.tanh %226 : vector<8x128xf32>
    %cst_93 = arith.constant 1.000000e+00 : f32
    %228 = vector.broadcast %cst_93 : f32 to vector<8x128xf32>
    %229 = arith.addf %227, %228 : vector<8x128xf32>
    %cst_94 = arith.constant 5.000000e-01 : f32
    %230 = vector.broadcast %cst_94 : f32 to vector<8x128xf32>
    %231 = arith.mulf %230, %229 : vector<8x128xf32>
    %232 = vector.extract_strided_slice %215 {offsets = [0, 256], sizes = [8, 128], strides = [1, 1]} : vector<8x512xf32> to vector<8x128xf32>
    %233 = math.tanh %232 : vector<8x128xf32>
    %234 = vector.extract_strided_slice %215 {offsets = [0, 384], sizes = [8, 128], strides = [1, 1]} : vector<8x512xf32> to vector<8x128xf32>
    %cst_95 = arith.constant 5.000000e-01 : f32
    %235 = vector.broadcast %cst_95 : f32 to vector<8x128xf32>
    %236 = arith.mulf %235, %234 : vector<8x128xf32>
    %237 = math.tanh %236 : vector<8x128xf32>
    %cst_96 = arith.constant 1.000000e+00 : f32
    %238 = vector.broadcast %cst_96 : f32 to vector<8x128xf32>
    %239 = arith.addf %237, %238 : vector<8x128xf32>
    %cst_97 = arith.constant 5.000000e-01 : f32
    %240 = vector.broadcast %cst_97 : f32 to vector<8x128xf32>
    %241 = arith.mulf %240, %239 : vector<8x128xf32>
    %242 = arith.mulf %231, %203 : vector<8x128xf32>
    %243 = arith.mulf %223, %233 : vector<8x128xf32>
    %244 = arith.addf %242, %243 : vector<8x128xf32>
    %245 = math.tanh %244 : vector<8x128xf32>
    %246 = arith.mulf %241, %245 : vector<8x128xf32>
    %247 = arith.index_cast %c5_i32 : i32 to index
    %c0_98 = arith.constant 0 : index
    %c0_99 = arith.constant 0 : index
    %248 = vector.load %arg6[%247, %c0_98, %c0_99] : memref<8x8x128xf32, #tpu.memory_space<vmem>>, vector<1x8x128xf32>
    %249 = vector.shape_cast %248 : vector<1x8x128xf32> to vector<8x128xf32>
    %250 = vector.shape_cast %246 : vector<8x128xf32> to vector<1x8x128xf32>
    tpu.vector_store %arg6[%247, %c0_98, %c0_99], %250 {strides = array<i32>} : memref<8x8x128xf32, #tpu.memory_space<vmem>>, vector<1x8x128xf32>,
    %c6_i32 = arith.constant 6 : i32
    %251 = arith.index_cast %c6_i32 : i32 to index
    %c0_100 = arith.constant 0 : index
    %c0_101 = arith.constant 0 : index
    %252 = vector.load %arg2[%251, %c0_100, %c0_101] : memref<8x8x512xf32, #tpu.memory_space<vmem>>, vector<1x8x512xf32>
    %253 = vector.shape_cast %252 : vector<1x8x512xf32> to vector<8x512xf32>
    %c0_102 = arith.constant 0 : index
    %c0_103 = arith.constant 0 : index
    %254 = vector.load %arg3[%c0_102, %c0_103] : memref<128x512xf32, #tpu.memory_space<vmem>>, vector<128x512xf32>
    %cst_104 = arith.constant dense<0.000000e+00> : vector<8x512xf32>
    %255 = tpu.matmul %246, %254, %cst_104 {dimension_numbers = #tpu.dot_dimension_numbers<[1], [0], [0], [1], [0, 0, 1, 1], [], []>} : vector<8x128xf32>, vector<128x512xf32>, vector<8x512xf32> -> vector<8x512xf32>
    %256 = arith.addf %253, %255 : vector<8x512xf32>
    %257 = vector.extract_strided_slice %256 {offsets = [0, 0], sizes = [8, 128], strides = [1, 1]} : vector<8x512xf32> to vector<8x128xf32>
    %cst_105 = arith.constant 5.000000e-01 : f32
    %258 = vector.broadcast %cst_105 : f32 to vector<8x128xf32>
    %259 = arith.mulf %258, %257 : vector<8x128xf32>
    %260 = math.tanh %259 : vector<8x128xf32>
    %cst_106 = arith.constant 1.000000e+00 : f32
    %261 = vector.broadcast %cst_106 : f32 to vector<8x128xf32>
    %262 = arith.addf %260, %261 : vector<8x128xf32>
    %cst_107 = arith.constant 5.000000e-01 : f32
    %263 = vector.broadcast %cst_107 : f32 to vector<8x128xf32>
    %264 = arith.mulf %263, %262 : vector<8x128xf32>
    %265 = vector.extract_strided_slice %256 {offsets = [0, 128], sizes = [8, 128], strides = [1, 1]} : vector<8x512xf32> to vector<8x128xf32>
    %cst_108 = arith.constant 5.000000e-01 : f32
    %266 = vector.broadcast %cst_108 : f32 to vector<8x128xf32>
    %267 = arith.mulf %266, %265 : vector<8x128xf32>
    %268 = math.tanh %267 : vector<8x128xf32>
    %cst_109 = arith.constant 1.000000e+00 : f32
    %269 = vector.broadcast %cst_109 : f32 to vector<8x128xf32>
    %270 = arith.addf %268, %269 : vector<8x128xf32>
    %cst_110 = arith.constant 5.000000e-01 : f32
    %271 = vector.broadcast %cst_110 : f32 to vector<8x128xf32>
    %272 = arith.mulf %271, %270 : vector<8x128xf32>
    %273 = vector.extract_strided_slice %256 {offsets = [0, 256], sizes = [8, 128], strides = [1, 1]} : vector<8x512xf32> to vector<8x128xf32>
    %274 = math.tanh %273 : vector<8x128xf32>
    %275 = vector.extract_strided_slice %256 {offsets = [0, 384], sizes = [8, 128], strides = [1, 1]} : vector<8x512xf32> to vector<8x128xf32>
    %cst_111 = arith.constant 5.000000e-01 : f32
    %276 = vector.broadcast %cst_111 : f32 to vector<8x128xf32>
    %277 = arith.mulf %276, %275 : vector<8x128xf32>
    %278 = math.tanh %277 : vector<8x128xf32>
    %cst_112 = arith.constant 1.000000e+00 : f32
    %279 = vector.broadcast %cst_112 : f32 to vector<8x128xf32>
    %280 = arith.addf %278, %279 : vector<8x128xf32>
    %cst_113 = arith.constant 5.000000e-01 : f32
    %281 = vector.broadcast %cst_113 : f32 to vector<8x128xf32>
    %282 = arith.mulf %281, %280 : vector<8x128xf32>
    %283 = arith.mulf %272, %244 : vector<8x128xf32>
    %284 = arith.mulf %264, %274 : vector<8x128xf32>
    %285 = arith.addf %283, %284 : vector<8x128xf32>
    %286 = math.tanh %285 : vector<8x128xf32>
    %287 = arith.mulf %282, %286 : vector<8x128xf32>
    %288 = arith.index_cast %c6_i32 : i32 to index
    %c0_114 = arith.constant 0 : index
    %c0_115 = arith.constant 0 : index
    %289 = vector.load %arg6[%288, %c0_114, %c0_115] : memref<8x8x128xf32, #tpu.memory_space<vmem>>, vector<1x8x128xf32>
    %290 = vector.shape_cast %289 : vector<1x8x128xf32> to vector<8x128xf32>
    %291 = vector.shape_cast %287 : vector<8x128xf32> to vector<1x8x128xf32>
    tpu.vector_store %arg6[%288, %c0_114, %c0_115], %291 {strides = array<i32>} : memref<8x8x128xf32, #tpu.memory_space<vmem>>, vector<1x8x128xf32>,
    %c7_i32 = arith.constant 7 : i32
    %292 = arith.index_cast %c7_i32 : i32 to index
    %c0_116 = arith.constant 0 : index
    %c0_117 = arith.constant 0 : index
    %293 = vector.load %arg2[%292, %c0_116, %c0_117] : memref<8x8x512xf32, #tpu.memory_space<vmem>>, vector<1x8x512xf32>
    %294 = vector.shape_cast %293 : vector<1x8x512xf32> to vector<8x512xf32>
    %c0_118 = arith.constant 0 : index
    %c0_119 = arith.constant 0 : index
    %295 = vector.load %arg3[%c0_118, %c0_119] : memref<128x512xf32, #tpu.memory_space<vmem>>, vector<128x512xf32>
    %cst_120 = arith.constant dense<0.000000e+00> : vector<8x512xf32>
    %296 = tpu.matmul %287, %295, %cst_120 {dimension_numbers = #tpu.dot_dimension_numbers<[1], [0], [0], [1], [0, 0, 1, 1], [], []>} : vector<8x128xf32>, vector<128x512xf32>, vector<8x512xf32> -> vector<8x512xf32>
    %297 = arith.addf %294, %296 : vector<8x512xf32>
    %298 = vector.extract_strided_slice %297 {offsets = [0, 0], sizes = [8, 128], strides = [1, 1]} : vector<8x512xf32> to vector<8x128xf32>
    %cst_121 = arith.constant 5.000000e-01 : f32
    %299 = vector.broadcast %cst_121 : f32 to vector<8x128xf32>
    %300 = arith.mulf %299, %298 : vector<8x128xf32>
    %301 = math.tanh %300 : vector<8x128xf32>
    %cst_122 = arith.constant 1.000000e+00 : f32
    %302 = vector.broadcast %cst_122 : f32 to vector<8x128xf32>
    %303 = arith.addf %301, %302 : vector<8x128xf32>
    %cst_123 = arith.constant 5.000000e-01 : f32
    %304 = vector.broadcast %cst_123 : f32 to vector<8x128xf32>
    %305 = arith.mulf %304, %303 : vector<8x128xf32>
    %306 = vector.extract_strided_slice %297 {offsets = [0, 128], sizes = [8, 128], strides = [1, 1]} : vector<8x512xf32> to vector<8x128xf32>
    %cst_124 = arith.constant 5.000000e-01 : f32
    %307 = vector.broadcast %cst_124 : f32 to vector<8x128xf32>
    %308 = arith.mulf %307, %306 : vector<8x128xf32>
    %309 = math.tanh %308 : vector<8x128xf32>
    %cst_125 = arith.constant 1.000000e+00 : f32
    %310 = vector.broadcast %cst_125 : f32 to vector<8x128xf32>
    %311 = arith.addf %309, %310 : vector<8x128xf32>
    %cst_126 = arith.constant 5.000000e-01 : f32
    %312 = vector.broadcast %cst_126 : f32 to vector<8x128xf32>
    %313 = arith.mulf %312, %311 : vector<8x128xf32>
    %314 = vector.extract_strided_slice %297 {offsets = [0, 256], sizes = [8, 128], strides = [1, 1]} : vector<8x512xf32> to vector<8x128xf32>
    %315 = math.tanh %314 : vector<8x128xf32>
    %316 = vector.extract_strided_slice %297 {offsets = [0, 384], sizes = [8, 128], strides = [1, 1]} : vector<8x512xf32> to vector<8x128xf32>
    %cst_127 = arith.constant 5.000000e-01 : f32
    %317 = vector.broadcast %cst_127 : f32 to vector<8x128xf32>
    %318 = arith.mulf %317, %316 : vector<8x128xf32>
    %319 = math.tanh %318 : vector<8x128xf32>
    %cst_128 = arith.constant 1.000000e+00 : f32
    %320 = vector.broadcast %cst_128 : f32 to vector<8x128xf32>
    %321 = arith.addf %319, %320 : vector<8x128xf32>
    %cst_129 = arith.constant 5.000000e-01 : f32
    %322 = vector.broadcast %cst_129 : f32 to vector<8x128xf32>
    %323 = arith.mulf %322, %321 : vector<8x128xf32>
    %324 = arith.mulf %313, %285 : vector<8x128xf32>
    %325 = arith.mulf %305, %315 : vector<8x128xf32>
    %326 = arith.addf %324, %325 : vector<8x128xf32>
    %327 = math.tanh %326 : vector<8x128xf32>
    %328 = arith.mulf %323, %327 : vector<8x128xf32>
    %329 = arith.index_cast %c7_i32 : i32 to index
    %c0_130 = arith.constant 0 : index
    %c0_131 = arith.constant 0 : index
    %330 = vector.load %arg6[%329, %c0_130, %c0_131] : memref<8x8x128xf32, #tpu.memory_space<vmem>>, vector<1x8x128xf32>
    %331 = vector.shape_cast %330 : vector<1x8x128xf32> to vector<8x128xf32>
    %332 = vector.shape_cast %328 : vector<8x128xf32> to vector<1x8x128xf32>
    tpu.vector_store %arg6[%329, %c0_130, %c0_131], %332 {strides = array<i32>} : memref<8x8x128xf32, #tpu.memory_space<vmem>>, vector<1x8x128xf32>,
    %c8_i32 = arith.constant 8 : i32
    %c0_132 = arith.constant 0 : index
    %c0_133 = arith.constant 0 : index
    %333 = vector.load %arg9[%c0_132, %c0_133] : memref<8x128xf32, #tpu.memory_space<vmem>>, vector<8x128xf32>
    tpu.vector_store %arg9[%c0_132, %c0_133], %328 {strides = array<i32>} : memref<8x128xf32, #tpu.memory_space<vmem>>, vector<8x128xf32>,
    %c0_134 = arith.constant 0 : index
    %c0_135 = arith.constant 0 : index
    %334 = vector.load %arg10[%c0_134, %c0_135] : memref<8x128xf32, #tpu.memory_space<vmem>>, vector<8x128xf32>
    tpu.vector_store %arg10[%c0_134, %c0_135], %326 {strides = array<i32>} : memref<8x128xf32, #tpu.memory_space<vmem>>, vector<8x128xf32>,
    %c0_i32_136 = arith.constant 0 : i32
    %335 = arith.cmpi eq, %arg1, %c0_i32_136 : i32
    %336 = arith.extui %335 : i1 to i32
    %c0_i32_137 = arith.constant 0 : i32
    %337 = arith.cmpi ne, %336, %c0_i32_137 : i32
    scf.if %337 {
      %c0_138 = arith.constant 0 : index
      %c0_139 = arith.constant 0 : index
      %338 = vector.load %arg7[%c0_138, %c0_139] : memref<8x128xf32, #tpu.memory_space<vmem>>, vector<8x128xf32>
      tpu.vector_store %arg7[%c0_138, %c0_139], %328 {strides = array<i32>} : memref<8x128xf32, #tpu.memory_space<vmem>>, vector<8x128xf32>,
      %c0_140 = arith.constant 0 : index
      %c0_141 = arith.constant 0 : index
      %339 = vector.load %arg8[%c0_140, %c0_141] : memref<8x128xf32, #tpu.memory_space<vmem>>, vector<8x128xf32>
      tpu.vector_store %arg8[%c0_140, %c0_141], %326 {strides = array<i32>} : memref<8x128xf32, #tpu.memory_space<vmem>>, vector<8x128xf32>,
    } else {
    }
    return
  }
  func.func @transform_0(%arg0: i32, %arg1: i32) -> (i32, i32, i32) {
    %c0_i32 = arith.constant 0 : i32
    %c0_i32_0 = arith.constant 0 : i32
    return %arg1, %arg0, %c0_i32 : i32, i32, i32
  }
  func.func @transform_1(%arg0: i32, %arg1: i32) -> (i32, i32) {
    %c0_i32 = arith.constant 0 : i32
    %c0_i32_0 = arith.constant 0 : i32
    %c0_i32_1 = arith.constant 0 : i32
    return %c0_i32, %c0_i32_0 : i32, i32
  }
  func.func @transform_2(%arg0: i32, %arg1: i32) -> (i32, i32) {
    %c0_i32 = arith.constant 0 : i32
    %c0_i32_0 = arith.constant 0 : i32
    return %arg0, %c0_i32 : i32, i32
  }
  func.func @transform_3(%arg0: i32, %arg1: i32) -> (i32, i32) {
    %c0_i32 = arith.constant 0 : i32
    %c0_i32_0 = arith.constant 0 : i32
    return %arg0, %c0_i32 : i32, i32
  }
  func.func @transform_4(%arg0: i32, %arg1: i32) -> (i32, i32, i32) {
    %c0_i32 = arith.constant 0 : i32
    %c0_i32_0 = arith.constant 0 : i32
    return %arg1, %arg0, %c0_i32 : i32, i32, i32
  }
  func.func @transform_5(%arg0: i32, %arg1: i32) -> (i32, i32) {
    %c0_i32 = arith.constant 0 : i32
    %c0_i32_0 = arith.constant 0 : i32
    return %arg0, %c0_i32 : i32, i32
  }
  func.func @transform_6(%arg0: i32, %arg1: i32) -> (i32, i32) {
    %c0_i32 = arith.constant 0 : i32
    %c0_i32_0 = arith.constant 0 : i32
    return %arg0, %c0_i32 : i32, i32
  }
}

</mosaic_0001>

<llo_original>
// kernel: lstm_pallas.1
$region0: #{lstm_pallas.1}
  #allocation0 [shape = 'u32[]', space=smem, size = 0x4, offset = 0x4, fixed_abs, tag = 'smem constant byte address 0x4 - core index']
  #allocation1 [shape = 'u32[144,128]{1,0:T(1,128)}', space=vmem, size = 0x12000, scoped, tag = 'internal scratch']
  #allocation2 [shape = 'f32[8,128]{1,0:T(8,128)}', space=vmem, size = 0x1000, scoped, tag = 'scratch operand']
  #allocation3 [shape = 'f32[8,128]{1,0:T(8,128)}', space=vmem, size = 0x1000, scoped, tag = 'scratch operand']
  %s0 = inlined_call_operand.vmem [shape: f32[8,8,512], index: 0, kind: input, shape index: {}]
  %s1 = inlined_call_operand.vmem [shape: f32[128,512], index: 1, kind: input, shape index: {}]
  %s2 = inlined_call_operand.vmem [shape: f32[8,128], index: 2, kind: input, shape index: {}]
  %s3 = inlined_call_operand.vmem [shape: f32[8,128], index: 3, kind: input, shape index: {}]
  %s4 = inlined_call_operand.vmem [shape: f32[8,8,128], index: 4, kind: output, shape index: {0}]
  %s5 = inlined_call_operand.vmem [shape: f32[8,128], index: 5, kind: output, shape index: {1}]
  %s6 = inlined_call_operand.vmem [shape: f32[8,128], index: 6, kind: output, shape index: {2}]
  %7 = xla_tuple %s4, %s5, %s6
  %s8 = sld [smem:[#allocation0]]
  $region50: #{lstm_pallas.1} parent=0
    _
  %s10 = ssub.s32 1, %s8
  %s11 = scalar_select 0, %s10, %s8
  // Predicated region
  $region2: #{lstm_pallas.1} parent=0 // pred_check
    _
  $region3: #{lstm_pallas.1} parent=0 // pred_check_branch
    %13 = sbr.rel (0) target = $region5
  $region4: #{lstm_pallas.1} parent=0 // pred_region
    _
  $region5: #{lstm_pallas.1} parent=0 // pred_fallthru
    _
  // Predicated region
  $region6: #{lstm_pallas.1} parent=0 // pred_check
    _
  $region7: #{lstm_pallas.1} parent=0 // pred_check_branch
    %15 = sbr.rel (0) target = $region9
  $region8: #{lstm_pallas.1} parent=0 // pred_region
    _
  $region9: #{lstm_pallas.1} parent=0 // pred_fallthru
    _
  // Predicated region
  $region10: #{lstm_pallas.1} parent=0 // pred_check
    _
  $region11: #{lstm_pallas.1} parent=0 // pred_check_branch
    %17 = sbr.rel (0) target = $region13
  $region12: #{lstm_pallas.1} parent=0 // pred_region
    _
  $region13: #{lstm_pallas.1} parent=0 // pred_fallthru
    _
  // Predicated region
  $region14: #{lstm_pallas.1} parent=0 // pred_check
    _
  $region15: #{lstm_pallas.1} parent=0 // pred_check_branch
    %19 = sbr.rel (0) target = $region17
  $region16: #{lstm_pallas.1} parent=0 // pred_region
    _
  $region17: #{lstm_pallas.1} parent=0 // pred_fallthru
    _
  %p20 = scmp.eq.s32.totalorder 0, 0
  // Predicated region
  $region18: #{lstm_pallas.1} parent=0 // pred_check
    %p21 = pneg %p20
  $region19: #{lstm_pallas.1} parent=0 // pred_check_branch
    %23 = sbr.rel (%p21) target = $region21
  $region20: #{lstm_pallas.1} parent=0 // pred_region
    %v24 = vld [vmem:[%s2] sm:$0xff]
    %25 = vst [vmem:[#allocation2] sm:$0xff] %v24
    %v26 = vld [vmem:[%s3] sm:$0xff]
    %27 = vst [vmem:[#allocation3] sm:$0xff] %v26
  $region21: #{lstm_pallas.1} parent=0 // pred_fallthru
    _
  %v28 = vld [vmem:[#allocation2] sm:$0xff]
  %v29 = vld [vmem:[#allocation3] sm:$0xff]
  %v30 = vld [vmem:[%s0] sm:$0xff]
  %v31 = vld [vmem:[%s0 + $0x8] sm:$0xff]
  %v32 = vld [vmem:[%s0 + $0x10] sm:$0xff]
  %v33 = vld [vmem:[%s0 + $0x18] sm:$0xff]
  %v34 = vld [vmem:[%s1] sm:$0xff]
  %v35 = vld [vmem:[%s1 + $0x8] sm:$0xff]
  %v36 = vld [vmem:[%s1 + $0x10] sm:$0xff]
  %v37 = vld [vmem:[%s1 + $0x18] sm:$0xff]
  %v38 = vld [vmem:[%s1 + $0x20] sm:$0xff]
  %v39 = vld [vmem:[%s1 + $0x28] sm:$0xff]
  %v40 = vld [vmem:[%s1 + $0x30] sm:$0xff]
  %v41 = vld [vmem:[%s1 + $0x38] sm:$0xff]
  %v42 = vld [vmem:[%s1 + $0x40] sm:$0xff]
  %v43 = vld [vmem:[%s1 + $0x48] sm:$0xff]
  %v44 = vld [vmem:[%s1 + $0x50] sm:$0xff]
  %v45 = vld [vmem:[%s1 + $0x58] sm:$0xff]
  %v46 = vld [vmem:[%s1 + $0x60] sm:$0xff]
  %v47 = vld [vmem:[%s1 + $0x68] sm:$0xff]
  %v48 = vld [vmem:[%s1 + $0x70] sm:$0xff]
  %v49 = vld [vmem:[%s1 + $0x78] sm:$0xff]
  %v50 = vld [vmem:[%s1 + $0x80] sm:$0xff]
  %v51 = vld [vmem:[%s1 + $0x88] sm:$0xff]
  %v52 = vld [vmem:[%s1 + $0x90] sm:$0xff]
  %v53 = vld [vmem:[%s1 + $0x98] sm:$0xff]
  %v54 = vld [vmem:[%s1 + $0xa0] sm:$0xff]
  %v55 = vld [vmem:[%s1 + $0xa8] sm:$0xff]
  %v56 = vld [vmem:[%s1 + $0xb0] sm:$0xff]
  %v57 = vld [vmem:[%s1 + $0xb8] sm:$0xff]
  %v58 = vld [vmem:[%s1 + $0xc0] sm:$0xff]
  %v59 = vld [vmem:[%s1 + $0xc8] sm:$0xff]
  %v60 = vld [vmem:[%s1 + $0xd0] sm:$0xff]
  %v61 = vld [vmem:[%s1 + $0xd8] sm:$0xff]
  %v62 = vld [vmem:[%s1 + $0xe0] sm:$0xff]
  %v63 = vld [vmem:[%s1 + $0xe8] sm:$0xff]
  %v64 = vld [vmem:[%s1 + $0xf0] sm:$0xff]
  %v65 = vld [vmem:[%s1 + $0xf8] sm:$0xff]
  %v66 = vld [vmem:[%s1 + $0x100] sm:$0xff]
  %v67 = vld [vmem:[%s1 + $0x108] sm:$0xff]
  %v68 = vld [vmem:[%s1 + $0x110] sm:$0xff]
  %v69 = vld [vmem:[%s1 + $0x118] sm:$0xff]
  %v70 = vld [vmem:[%s1 + $0x120] sm:$0xff]
  %v71 = vld [vmem:[%s1 + $0x128] sm:$0xff]
  %v72 = vld [vmem:[%s1 + $0x130] sm:$0xff]
  %v73 = vld [vmem:[%s1 + $0x138] sm:$0xff]
  %v74 = vld [vmem:[%s1 + $0x140] sm:$0xff]
  %v75 = vld [vmem:[%s1 + $0x148] sm:$0xff]
  %v76 = vld [vmem:[%s1 + $0x150] sm:$0xff]
  %v77 = vld [vmem:[%s1 + $0x158] sm:$0xff]
  %v78 = vld [vmem:[%s1 + $0x160] sm:$0xff]
  %v79 = vld [vmem:[%s1 + $0x168] sm:$0xff]
  %v80 = vld [vmem:[%s1 + $0x170] sm:$0xff]
  %v81 = vld [vmem:[%s1 + $0x178] sm:$0xff]
  %v82 = vld [vmem:[%s1 + $0x180] sm:$0xff]
  %v83 = vld [vmem:[%s1 + $0x188] sm:$0xff]
  %v84 = vld [vmem:[%s1 + $0x190] sm:$0xff]
  %v85 = vld [vmem:[%s1 + $0x198] sm:$0xff]
  %v86 = vld [vmem:[%s1 + $0x1a0] sm:$0xff]
  %v87 = vld [vmem:[%s1 + $0x1a8] sm:$0xff]
  %v88 = vld [vmem:[%s1 + $0x1b0] sm:$0xff]
  %v89 = vld [vmem:[%s1 + $0x1b8] sm:$0xff]
  %v90 = vld [vmem:[%s1 + $0x1c0] sm:$0xff]
  %v91 = vld [vmem:[%s1 + $0x1c8] sm:$0xff]
  %v92 = vld [vmem:[%s1 + $0x1d0] sm:$0xff]
  %v93 = vld [vmem:[%s1 + $0x1d8] sm:$0xff]
  %v94 = vld [vmem:[%s1 + $0x1e0] sm:$0xff]
  %v95 = vld [vmem:[%s1 + $0x1e8] sm:$0xff]
  %v96 = vld [vmem:[%s1 + $0x1f0] sm:$0xff]
  %v97 = vld [vmem:[%s1 + $0x1f8] sm:$0xff]
  %98 = vmatprep.subr.mxu0 %v95
  %99 = vmatpush1.msra.mxu0 %v94
  %100 = vmatprep.subr.mxu0 %v91
  %101 = vmatpush1.msra.mxu0 %v90
  %102 = vmatprep.subr.mxu0 %v87
  %103 = vmatpush1.msra.mxu0 %v86
  %104 = vmatprep.subr.mxu0 %v83
  %105 = vmatpush1.msra.mxu0 %v82
  %106 = vmatprep.subr.mxu0 %v79
  %107 = vmatpush1.msra.mxu0 %v78
  %108 = vmatprep.subr.mxu0 %v75
  %109 = vmatpush1.msra.mxu0 %v74
  %110 = vmatprep.subr.mxu0 %v71
  %111 = vmatpush1.msra.mxu0 %v70
  %112 = vmatprep.subr.mxu0 %v67
  %113 = vmatpush1.msra.mxu0 %v66
  %114 = vmatprep.subr.mxu0 %v63
  %115 = vmatpush1.msra.mxu0 %v62
  %116 = vmatprep.subr.mxu0 %v59
  %117 = vmatpush1.msra.mxu0 %v58
  %118 = vmatprep.subr.mxu0 %v55
  %119 = vmatpush1.msra.mxu0 %v54
  %120 = vmatprep.subr.mxu0 %v51
  %121 = vmatpush1.msra.mxu0 %v50
  %122 = vmatprep.subr.mxu0 %v47
  %123 = vmatpush1.msra.mxu0 %v46
  %124 = vmatprep.subr.mxu0 %v43
  %125 = vmatpush1.msra.mxu0 %v42
  %126 = vmatprep.subr.mxu0 %v39
  %127 = vmatpush1.msra.mxu0 %v38
  %128 = vmatprep.subr.mxu0 %v35
  %129 = vmatpush1.msra.mxu0 %v34
  %130 = vmatprep.subr.mxu0 0.0
  %131 = vmatpush2.msra.mxu0 0.0
  %132 = vmatprep.subr.mxu0 0.0
  %133 = vmatpush2.msra.mxu0 0.0
  %134 = vmatprep.subr.mxu0 0.0
  %135 = vmatpush2.msra.mxu0 0.0
  %136 = vmatprep.subr.mxu0 0.0
  %137 = vmatpush2.msra.mxu0 0.0
  %138 = vmatprep.subr.mxu0 0.0
  %139 = vmatpush2.msra.mxu0 0.0
  %140 = vmatprep.subr.mxu0 0.0
  %141 = vmatpush2.msra.mxu0 0.0
  %142 = vmatprep.subr.mxu0 0.0
  %143 = vmatpush2.msra.mxu0 0.0
  %144 = vmatprep.subr.mxu0 0.0
  %145 = vmatpush2.msra.mxu0 0.0
  %146 = vmatprep.subr.mxu0 0.0
  %147 = vmatpush2.msra.mxu0 0.0
  %148 = vmatprep.subr.mxu0 0.0
  %149 = vmatpush2.msra.mxu0 0.0
  %150 = vmatprep.subr.mxu0 0.0
  %151 = vmatpush2.msra.mxu0 0.0
  %152 = vmatprep.subr.mxu0 0.0
  %153 = vmatpush2.msra.mxu0 0.0
  %154 = vmatprep.subr.mxu0 0.0
  %155 = vmatpush2.msra.mxu0 0.0
  %156 = vmatprep.subr.mxu0 0.0
  %157 = vmatpush2.msra.mxu0 0.0
  %158 = vmatprep.subr.mxu0 0.0
  %159 = vmatpush2.msra.mxu0 0.0
  %160 = vmatprep.subr.mxu0 0.0
  %161 = vmatpush2.msra.mxu0 0.0
  %162 = vmatprep.mubr.f32.mxu0 0.0
  %163 = vmatmul.mubr.f32.gmra.mxu0 %v28
  %v164 = vpop.f32.mrf.mxu0
  %v165 = vadd.f32 0.0, %v164
  %v166 = vpop.f32.mrf.mxu0
  %v167 = vadd.f32 0.0, %v166
  %168 = vdwg.mxu0
  %169 = vmatprep.subr.mxu0 %v97
  %170 = vmatpush1.msra.mxu0 %v96
  %171 = vmatprep.subr.mxu0 %v93
  %172 = vmatpush1.msra.mxu0 %v92
  %173 = vmatprep.subr.mxu0 %v89
  %174 = vmatpush1.msra.mxu0 %v88
  %175 = vmatprep.subr.mxu0 %v85
  %176 = vmatpush1.msra.mxu0 %v84
  %177 = vmatprep.subr.mxu0 %v81
  %178 = vmatpush1.msra.mxu0 %v80
  %179 = vmatprep.subr.mxu0 %v77
  %180 = vmatpush1.msra.mxu0 %v76
  %181 = vmatprep.subr.mxu0 %v73
  %182 = vmatpush1.msra.mxu0 %v72
  %183 = vmatprep.subr.mxu0 %v69
  %184 = vmatpush1.msra.mxu0 %v68
  %185 = vmatprep.subr.mxu0 %v65
  %186 = vmatpush1.msra.mxu0 %v64
  %187 = vmatprep.subr.mxu0 %v61
  %188 = vmatpush1.msra.mxu0 %v60
  %189 = vmatprep.subr.mxu0 %v57
  %190 = vmatpush1.msra.mxu0 %v56
  %191 = vmatprep.subr.mxu0 %v53
  %192 = vmatpush1.msra.mxu0 %v52
  %193 = vmatprep.subr.mxu0 %v49
  %194 = vmatpush1.msra.mxu0 %v48
  %195 = vmatprep.subr.mxu0 %v45
  %196 = vmatpush1.msra.mxu0 %v44
  %197 = vmatprep.subr.mxu0 %v41
  %198 = vmatpush1.msra.mxu0 %v40
  %199 = vmatprep.subr.mxu0 %v37
  %200 = vmatpush1.msra.mxu0 %v36
  %201 = vmatprep.subr.mxu0 0.0
  %202 = vmatpush2.msra.mxu0 0.0
  %203 = vmatprep.subr.mxu0 0.0
  %204 = vmatpush2.msra.mxu0 0.0
  %205 = vmatprep.subr.mxu0 0.0
  %206 = vmatpush2.msra.mxu0 0.0
  %207 = vmatprep.subr.mxu0 0.0
  %208 = vmatpush2.msra.mxu0 0.0
  %209 = vmatprep.subr.mxu0 0.0
  %210 = vmatpush2.msra.mxu0 0.0
  %211 = vmatprep.subr.mxu0 0.0
  %212 = vmatpush2.msra.mxu0 0.0
  %213 = vmatprep.subr.mxu0 0.0
  %214 = vmatpush2.msra.mxu0 0.0
  %215 = vmatprep.subr.mxu0 0.0
  %216 = vmatpush2.msra.mxu0 0.0
  %217 = vmatprep.subr.mxu0 0.0
  %218 = vmatpush2.msra.mxu0 0.0
  %219 = vmatprep.subr.mxu0 0.0
  %220 = vmatpush2.msra.mxu0 0.0
  %221 = vmatprep.subr.mxu0 0.0
  %222 = vmatpush2.msra.mxu0 0.0
  %223 = vmatprep.subr.mxu0 0.0
  %224 = vmatpush2.msra.mxu0 0.0
  %225 = vmatprep.subr.mxu0 0.0
  %226 = vmatpush2.msra.mxu0 0.0
  %227 = vmatprep.subr.mxu0 0.0
  %228 = vmatpush2.msra.mxu0 0.0
  %229 = vmatprep.subr.mxu0 0.0
  %230 = vmatpush2.msra.mxu0 0.0
  %231 = vmatprep.subr.mxu0 0.0
  %232 = vmatpush2.msra.mxu0 0.0
  %233 = vmatprep.mubr.f32.mxu0 0.0
  %234 = vmatmul.mubr.f32.gmra.mxu0 %v28
  %v235 = vpop.f32.mrf.mxu0
  %v236 = vadd.f32 0.0, %v235
  %v237 = vpop.f32.mrf.mxu0
  %v238 = vadd.f32 0.0, %v237
  %239 = vdwg.mxu0
  %v240 = vadd.f32 %v30, %v165
  %v241 = vadd.f32 %v31, %v167
  %v242 = vadd.f32 %v32, %v236
  %v243 = vadd.f32 %v33, %v238
  %v244 = vmul.f32 %v240, 0.5
  %v245 = vtanh.pop %v244
  %v246 = vadd.f32 %v245, 1.0
  %v247 = vmul.f32 %v246, 0.5
  %v248 = vmul.f32 %v241, 0.5
  %v249 = vtanh.pop %v248
  %v250 = vadd.f32 %v249, 1.0
  %v251 = vmul.f32 %v250, 0.5
  %v252 = vtanh.pop %v242
  %v253 = vmul.f32 %v243, 0.5
  %v254 = vtanh.pop %v253
  %v255 = vadd.f32 %v254, 1.0
  %v256 = vmul.f32 %v255, 0.5
  %v257 = vmul.f32 %v251, %v29
  %v258 = vmul.f32 %v247, %v252
  %v259 = vadd.f32 %v257, %v258
  %v260 = vtanh.pop %v259
  %v261 = vmul.f32 %v256, %v260
  %262 = vst [vmem:[%s4] sm:$0xff] %v261
  %s263 = scalar_lea.vmem %s0, 32
  %v264 = vld [vmem:[%s263] sm:$0xff]
  %v265 = vld [vmem:[%s263 + $0x8] sm:$0xff]
  %v266 = vld [vmem:[%s263 + $0x10] sm:$0xff]
  %v267 = vld [vmem:[%s263 + $0x18] sm:$0xff]
  %v268 = vld [vmem:[%s1] sm:$0xff]
  %v269 = vld [vmem:[%s1 + $0x8] sm:$0xff]
  %v270 = vld [vmem:[%s1 + $0x10] sm:$0xff]
  %v271 = vld [vmem:[%s1 + $0x18] sm:$0xff]
  %v272 = vld [vmem:[%s1 + $0x20] sm:$0xff]
  %v273 = vld [vmem:[%s1 + $0x28] sm:$0xff]
  %v274 = vld [vmem:[%s1 + $0x30] sm:$0xff]
  %v275 = vld [vmem:[%s1 + $0x38] sm:$0xff]
  %v276 = vld [vmem:[%s1 + $0x40] sm:$0xff]
  %v277 = vld [vmem:[%s1 + $0x48] sm:$0xff]
  %v278 = vld [vmem:[%s1 + $0x50] sm:$0xff]
  %v279 = vld [vmem:[%s1 + $0x58] sm:$0xff]
  %v280 = vld [vmem:[%s1 + $0x60] sm:$0xff]
  %v281 = vld [vmem:[%s1 + $0x68] sm:$0xff]
  %v282 = vld [vmem:[%s1 + $0x70] sm:$0xff]
  %v283 = vld [vmem:[%s1 + $0x78] sm:$0xff]
  %v284 = vld [vmem:[%s1 + $0x80] sm:$0xff]
  %v285 = vld [vmem:[%s1 + $0x88] sm:$0xff]
  %v286 = vld [vmem:[%s1 + $0x90] sm:$0xff]
  %v287 = vld [vmem:[%s1 + $0x98] sm:$0xff]
  %v288 = vld [vmem:[%s1 + $0xa0] sm:$0xff]
  %v289 = vld [vmem:[%s1 + $0xa8] sm:$0xff]
  %v290 = vld [vmem:[%s1 + $0xb0] sm:$0xff]
  %v291 = vld [vmem:[%s1 + $0xb8] sm:$0xff]
  %v292 = vld [vmem:[%s1 + $0xc0] sm:$0xff]
  %v293 = vld [vmem:[%s1 + $0xc8] sm:$0xff]
  %v294 = vld [vmem:[%s1 + $0xd0] sm:$0xff]
  %v295 = vld [vmem:[%s1 + $0xd8] sm:$0xff]
  %v296 = vld [vmem:[%s1 + $0xe0] sm:$0xff]
  %v297 = vld [vmem:[%s1 + $0xe8] sm:$0xff]
  %v298 = vld [vmem:[%s1 + $0xf0] sm:$0xff]
  %v299 = vld [vmem:[%s1 + $0xf8] sm:$0xff]
  %v300 = vld [vmem:[%s1 + $0x100] sm:$0xff]
  %v301 = vld [vmem:[%s1 + $0x108] sm:$0xff]
  %v302 = vld [vmem:[%s1 + $0x110] sm:$0xff]
  %v303 = vld [vmem:[%s1 + $0x118] sm:$0xff]
  %v304 = vld [vmem:[%s1 + $0x120] sm:$0xff]
  %v305 = vld [vmem:[%s1 + $0x128] sm:$0xff]
  %v306 = vld [vmem:[%s1 + $0x130] sm:$0xff]
  %v307 = vld [vmem:[%s1 + $0x138] sm:$0xff]
  %v308 = vld [vmem:[%s1 + $0x140] sm:$0xff]
  %v309 = vld [vmem:[%s1 + $0x148] sm:$0xff]
  %v310 = vld [vmem:[%s1 + $0x150] sm:$0xff]
  %v311 = vld [vmem:[%s1 + $0x158] sm:$0xff]
  %v312 = vld [vmem:[%s1 + $0x160] sm:$0xff]
  %v313 = vld [vmem:[%s1 + $0x168] sm:$0xff]
  %v314 = vld [vmem:[%s1 + $0x170] sm:$0xff]
  %v315 = vld [vmem:[%s1 + $0x178] sm:$0xff]
  %v316 = vld [vmem:[%s1 + $0x180] sm:$0xff]
  %v317 = vld [vmem:[%s1 + $0x188] sm:$0xff]
  %v318 = vld [vmem:[%s1 + $0x190] sm:$0xff]
  %v319 = vld [vmem:[%s1 + $0x198] sm:$0xff]
  %v320 = vld [vmem:[%s1 + $0x1a0] sm:$0xff]
  %v321 = vld [vmem:[%s1 + $0x1a8] sm:$0xff]
  %v322 = vld [vmem:[%s1 + $0x1b0] sm:$0xff]
  %v323 = vld [vmem:[%s1 + $0x1b8] sm:$0xff]
  %v324 = vld [vmem:[%s1 + $0x1c0] sm:$0xff]
  %v325 = vld [vmem:[%s1 + $0x1c8] sm:$0xff]
  %v326 = vld [vmem:[%s1 + $0x1d0] sm:$0xff]
  %v327 = vld [vmem:[%s1 + $0x1d8] sm:$0xff]
  %v328 = vld [vmem:[%s1 + $0x1e0] sm:$0xff]
  %v329 = vld [vmem:[%s1 + $0x1e8] sm:$0xff]
  %v330 = vld [vmem:[%s1 + $0x1f0] sm:$0xff]
  %v331 = vld [vmem:[%s1 + $0x1f8] sm:$0xff]
  %332 = vmatprep.subr.mxu0 %v329
  %333 = vmatpush1.msra.mxu0 %v328
  %334 = vmatprep.subr.mxu0 %v325
  %335 = vmatpush1.msra.mxu0 %v324
  %336 = vmatprep.subr.mxu0 %v321
  %337 = vmatpush1.msra.mxu0 %v320
  %338 = vmatprep.subr.mxu0 %v317
  %339 = vmatpush1.msra.mxu0 %v316
  %340 = vmatprep.subr.mxu0 %v313
  %341 = vmatpush1.msra.mxu0 %v312
  %342 = vmatprep.subr.mxu0 %v309
  %343 = vmatpush1.msra.mxu0 %v308
  %344 = vmatprep.subr.mxu0 %v305
  %345 = vmatpush1.msra.mxu0 %v304
  %346 = vmatprep.subr.mxu0 %v301
  %347 = vmatpush1.msra.mxu0 %v300
  %348 = vmatprep.subr.mxu0 %v297
  %349 = vmatpush1.msra.mxu0 %v296
  %350 = vmatprep.subr.mxu0 %v293
  %351 = vmatpush1.msra.mxu0 %v292
  %352 = vmatprep.subr.mxu0 %v289
  %353 = vmatpush1.msra.mxu0 %v288
  %354 = vmatprep.subr.mxu0 %v285
  %355 = vmatpush1.msra.mxu0 %v284
  %356 = vmatprep.subr.mxu0 %v281
  %357 = vmatpush1.msra.mxu0 %v280
  %358 = vmatprep.subr.mxu0 %v277
  %359 = vmatpush1.msra.mxu0 %v276
  %360 = vmatprep.subr.mxu0 %v273
  %361 = vmatpush1.msra.mxu0 %v272
  %362 = vmatprep.subr.mxu0 %v269
  %363 = vmatpush1.msra.mxu0 %v268
  %364 = vmatprep.subr.mxu0 0.0
  %365 = vmatpush2.msra.mxu0 0.0
  %366 = vmatprep.subr.mxu0 0.0
  %367 = vmatpush2.msra.mxu0 0.0
  %368 = vmatprep.subr.mxu0 0.0
  %369 = vmatpush2.msra.mxu0 0.0
  %370 = vmatprep.subr.mxu0 0.0
  %371 = vmatpush2.msra.mxu0 0.0
  %372 = vmatprep.subr.mxu0 0.0
  %373 = vmatpush2.msra.mxu0 0.0
  %374 = vmatprep.subr.mxu0 0.0
  %375 = vmatpush2.msra.mxu0 0.0
  %376 = vmatprep.subr.mxu0 0.0
  %377 = vmatpush2.msra.mxu0 0.0
  %378 = vmatprep.subr.mxu0 0.0
  %379 = vmatpush2.msra.mxu0 0.0
  %380 = vmatprep.subr.mxu0 0.0
  %381 = vmatpush2.msra.mxu0 0.0
  %382 = vmatprep.subr.mxu0 0.0
  %383 = vmatpush2.msra.mxu0 0.0
  %384 = vmatprep.subr.mxu0 0.0
  %385 = vmatpush2.msra.mxu0 0.0
  %386 = vmatprep.subr.mxu0 0.0
  %387 = vmatpush2.msra.mxu0 0.0
  %388 = vmatprep.subr.mxu0 0.0
  %389 = vmatpush2.msra.mxu0 0.0
  %390 = vmatprep.subr.mxu0 0.0
  %391 = vmatpush2.msra.mxu0 0.0
  %392 = vmatprep.subr.mxu0 0.0
  %393 = vmatpush2.msra.mxu0 0.0
  %394 = vmatprep.subr.mxu0 0.0
  %395 = vmatpush2.msra.mxu0 0.0
  %396 = vmatprep.mubr.f32.mxu0 0.0
  %397 = vmatmul.mubr.f32.gmra.mxu0 %v261
  %v398 = vpop.f32.mrf.mxu0
  %v399 = vadd.f32 0.0, %v398
  %v400 = vpop.f32.mrf.mxu0
  %v401 = vadd.f32 0.0, %v400
  %402 = vdwg.mxu0
  %403 = vmatprep.subr.mxu0 %v331
  %404 = vmatpush1.msra.mxu0 %v330
  %405 = vmatprep.subr.mxu0 %v327
  %406 = vmatpush1.msra.mxu0 %v326
  %407 = vmatprep.subr.mxu0 %v323
  %408 = vmatpush1.msra.mxu0 %v322
  %409 = vmatprep.subr.mxu0 %v319
  %410 = vmatpush1.msra.mxu0 %v318
  %411 = vmatprep.subr.mxu0 %v315
  %412 = vmatpush1.msra.mxu0 %v314
  %413 = vmatprep.subr.mxu0 %v311
  %414 = vmatpush1.msra.mxu0 %v310
  %415 = vmatprep.subr.mxu0 %v307
  %416 = vmatpush1.msra.mxu0 %v306
  %417 = vmatprep.subr.mxu0 %v303
  %418 = vmatpush1.msra.mxu0 %v302
  %419 = vmatprep.subr.mxu0 %v299
  %420 = vmatpush1.msra.mxu0 %v298
  %421 = vmatprep.subr.mxu0 %v295
  %422 = vmatpush1.msra.mxu0 %v294
  %423 = vmatprep.subr.mxu0 %v291
  %424 = vmatpush1.msra.mxu0 %v290
  %425 = vmatprep.subr.mxu0 %v287
  %426 = vmatpush1.msra.mxu0 %v286
  %427 = vmatprep.subr.mxu0 %v283
  %428 = vmatpush1.msra.mxu0 %v282
  %429 = vmatprep.subr.mxu0 %v279
  %430 = vmatpush1.msra.mxu0 %v278
  %431 = vmatprep.subr.mxu0 %v275
  %432 = vmatpush1.msra.mxu0 %v274
  %433 = vmatprep.subr.mxu0 %v271
  %434 = vmatpush1.msra.mxu0 %v270
  %435 = vmatprep.subr.mxu0 0.0
  %436 = vmatpush2.msra.mxu0 0.0
  %437 = vmatprep.subr.mxu0 0.0
  %438 = vmatpush2.msra.mxu0 0.0
  %439 = vmatprep.subr.mxu0 0.0
  %440 = vmatpush2.msra.mxu0 0.0
  %441 = vmatprep.subr.mxu0 0.0
  %442 = vmatpush2.msra.mxu0 0.0
  %443 = vmatprep.subr.mxu0 0.0
  %444 = vmatpush2.msra.mxu0 0.0
  %445 = vmatprep.subr.mxu0 0.0
  %446 = vmatpush2.msra.mxu0 0.0
  %447 = vmatprep.subr.mxu0 0.0
  %448 = vmatpush2.msra.mxu0 0.0
  %449 = vmatprep.subr.mxu0 0.0
  %450 = vmatpush2.msra.mxu0 0.0
  %451 = vmatprep.subr.mxu0 0.0
  %452 = vmatpush2.msra.mxu0 0.0
  %453 = vmatprep.subr.mxu0 0.0
  %454 = vmatpush2.msra.mxu0 0.0
  %455 = vmatprep.subr.mxu0 0.0
  %456 = vmatpush2.msra.mxu0 0.0
  %457 = vmatprep.subr.mxu0 0.0
  %458 = vmatpush2.msra.mxu0 0.0
  %459 = vmatprep.subr.mxu0 0.0
  %460 = vmatpush2.msra.mxu0 0.0
  %461 = vmatprep.subr.mxu0 0.0
  %462 = vmatpush2.msra.mxu0 0.0
  %463 = vmatprep.subr.mxu0 0.0
  %464 = vmatpush2.msra.mxu0 0.0
  %465 = vmatprep.subr.mxu0 0.0
  %466 = vmatpush2.msra.mxu0 0.0
  %467 = vmatprep.mubr.f32.mxu0 0.0
  %468 = vmatmul.mubr.f32.gmra.mxu0 %v261
  %v469 = vpop.f32.mrf.mxu0
  %v470 = vadd.f32 0.0, %v469
  %v471 = vpop.f32.mrf.mxu0
  %v472 = vadd.f32 0.0, %v471
  %473 = vdwg.mxu0
  %v474 = vadd.f32 %v264, %v399
  %v475 = vadd.f32 %v265, %v401
  %v476 = vadd.f32 %v266, %v470
  %v477 = vadd.f32 %v267, %v472
  %v478 = vmul.f32 %v474, 0.5
  %v479 = vtanh.pop %v478
  %v480 = vadd.f32 %v479, 1.0
  %v481 = vmul.f32 %v480, 0.5
  %v482 = vmul.f32 %v475, 0.5
  %v483 = vtanh.pop %v482
  %v484 = vadd.f32 %v483, 1.0
  %v485 = vmul.f32 %v484, 0.5
  %v486 = vtanh.pop %v476
  %v487 = vmul.f32 %v477, 0.5
  %v488 = vtanh.pop %v487
  %v489 = vadd.f32 %v488, 1.0
  %v490 = vmul.f32 %v489, 0.5
  %v491 = vmul.f32 %v485, %v259
  %v492 = vmul.f32 %v481, %v486
  %v493 = vadd.f32 %v491, %v492
  %v494 = vtanh.pop %v493
  %v495 = vmul.f32 %v490, %v494
  %s496 = scalar_lea.vmem %s4, 8
  %497 = vst [vmem:[%s496] sm:$0xff] %v495
  %s498 = scalar_lea.vmem %s0, 64
  %v499 = vld [vmem:[%s498] sm:$0xff]
  %v500 = vld [vmem:[%s498 + $0x8] sm:$0xff]
  %v501 = vld [vmem:[%s498 + $0x10] sm:$0xff]
  %v502 = vld [vmem:[%s498 + $0x18] sm:$0xff]
  %v503 = vld [vmem:[%s1] sm:$0xff]
  %v504 = vld [vmem:[%s1 + $0x8] sm:$0xff]
  %v505 = vld [vmem:[%s1 + $0x10] sm:$0xff]
  %v506 = vld [vmem:[%s1 + $0x18] sm:$0xff]
  %v507 = vld [vmem:[%s1 + $0x20] sm:$0xff]
  %v508 = vld [vmem:[%s1 + $0x28] sm:$0xff]
  %v509 = vld [vmem:[%s1 + $0x30] sm:$0xff]
  %v510 = vld [vmem:[%s1 + $0x38] sm:$0xff]
  %v511 = vld [vmem:[%s1 + $0x40] sm:$0xff]
  %v512 = vld [vmem:[%s1 + $0x48] sm:$0xff]
  %v513 = vld [vmem:[%s1 + $0x50] sm:$0xff]
  %v514 = vld [vmem:[%s1 + $0x58] sm:$0xff]
  %v515 = vld [vmem:[%s1 + $0x60] sm:$0xff]
  %v516 = vld [vmem:[%s1 + $0x68] sm:$0xff]
  %v517 = vld [vmem:[%s1 + $0x70] sm:$0xff]
  %v518 = vld [vmem:[%s1 + $0x78] sm:$0xff]
  %v519 = vld [vmem:[%s1 + $0x80] sm:$0xff]
  %v520 = vld [vmem:[%s1 + $0x88] sm:$0xff]
  %v521 = vld [vmem:[%s1 + $0x90] sm:$0xff]
  %v522 = vld [vmem:[%s1 + $0x98] sm:$0xff]
  %v523 = vld [vmem:[%s1 + $0xa0] sm:$0xff]
  %v524 = vld [vmem:[%s1 + $0xa8] sm:$0xff]
  %v525 = vld [vmem:[%s1 + $0xb0] sm:$0xff]
  %v526 = vld [vmem:[%s1 + $0xb8] sm:$0xff]
  %v527 = vld [vmem:[%s1 + $0xc0] sm:$0xff]
  %v528 = vld [vmem:[%s1 + $0xc8] sm:$0xff]
  %v529 = vld [vmem:[%s1 + $0xd0] sm:$0xff]
  %v530 = vld [vmem:[%s1 + $0xd8] sm:$0xff]
  %v531 = vld [vmem:[%s1 + $0xe0] sm:$0xff]
  %v532 = vld [vmem:[%s1 + $0xe8] sm:$0xff]
  %v533 = vld [vmem:[%s1 + $0xf0] sm:$0xff]
  %v534 = vld [vmem:[%s1 + $0xf8] sm:$0xff]
  %v535 = vld [vmem:[%s1 + $0x100] sm:$0xff]
  %v536 = vld [vmem:[%s1 + $0x108] sm:$0xff]
  %v537 = vld [vmem:[%s1 + $0x110] sm:$0xff]
  %v538 = vld [vmem:[%s1 + $0x118] sm:$0xff]
  %v539 = vld [vmem:[%s1 + $0x120] sm:$0xff]
  %v540 = vld [vmem:[%s1 + $0x128] sm:$0xff]
  %v541 = vld [vmem:[%s1 + $0x130] sm:$0xff]
  %v542 = vld [vmem:[%s1 + $0x138] sm:$0xff]
  %v543 = vld [vmem:[%s1 + $0x140] sm:$0xff]
  %v544 = vld [vmem:[%s1 + $0x148] sm:$0xff]
  %v545 = vld [vmem:[%s1 + $0x150] sm:$0xff]
  %v546 = vld [vmem:[%s1 + $0x158] sm:$0xff]
  %v547 = vld [vmem:[%s1 + $0x160] sm:$0xff]
  %v548 = vld [vmem:[%s1 + $0x168] sm:$0xff]
  %v549 = vld [vmem:[%s1 + $0x170] sm:$0xff]
  %v550 = vld [vmem:[%s1 + $0x178] sm:$0xff]
  %v551 = vld [vmem:[%s1 + $0x180] sm:$0xff]
  %v552 = vld [vmem:[%s1 + $0x188] sm:$0xff]
  %v553 = vld [vmem:[%s1 + $0x190] sm:$0xff]
  %v554 = vld [vmem:[%s1 + $0x198] sm:$0xff]
  %v555 = vld [vmem:[%s1 + $0x1a0] sm:$0xff]
  %v556 = vld [vmem:[%s1 + $0x1a8] sm:$0xff]
  %v557 = vld [vmem:[%s1 + $0x1b0] sm:$0xff]
  %v558 = vld [vmem:[%s1 + $0x1b8] sm:$0xff]
  %v559 = vld [vmem:[%s1 + $0x1c0] sm:$0xff]
  %v560 = vld [vmem:[%s1 + $0x1c8] sm:$0xff]
  %v561 = vld [vmem:[%s1 + $0x1d0] sm:$0xff]
  %v562 = vld [vmem:[%s1 + $0x1d8] sm:$0xff]
  %v563 = vld [vmem:[%s1 + $0x1e0] sm:$0xff]
  %v564 = vld [vmem:[%s1 + $0x1e8] sm:$0xff]
  %v565 = vld [vmem:[%s1 + $0x1f0] sm:$0xff]
  %v566 = vld [vmem:[%s1 + $0x1f8] sm:$0xff]
  %567 = vmatprep.subr.mxu0 %v564
  %568 = vmatpush1.msra.mxu0 %v563
  %569 = vmatprep.subr.mxu0 %v560
  %570 = vmatpush1.msra.mxu0 %v559
  %571 = vmatprep.subr.mxu0 %v556
  %572 = vmatpush1.msra.mxu0 %v555
  %573 = vmatprep.subr.mxu0 %v552
  %574 = vmatpush1.msra.mxu0 %v551
  %575 = vmatprep.subr.mxu0 %v548
  %576 = vmatpush1.msra.mxu0 %v547
  %577 = vmatprep.subr.mxu0 %v544
  %578 = vmatpush1.msra.mxu0 %v543
  %579 = vmatprep.subr.mxu0 %v540
  %580 = vmatpush1.msra.mxu0 %v539
  %581 = vmatprep.subr.mxu0 %v536
  %582 = vmatpush1.msra.mxu0 %v535
  %583 = vmatprep.subr.mxu0 %v532
  %584 = vmatpush1.msra.mxu0 %v531
  %585 = vmatprep.subr.mxu0 %v528
  %586 = vmatpush1.msra.mxu0 %v527
  %587 = vmatprep.subr.mxu0 %v524
  %588 = vmatpush1.msra.mxu0 %v523
  %589 = vmatprep.subr.mxu0 %v520
  %590 = vmatpush1.msra.mxu0 %v519
  %591 = vmatprep.subr.mxu0 %v516
  %592 = vmatpush1.msra.mxu0 %v515
  %593 = vmatprep.subr.mxu0 %v512
  %594 = vmatpush1.msra.mxu0 %v511
  %595 = vmatprep.subr.mxu0 %v508
  %596 = vmatpush1.msra.mxu0 %v507
  %597 = vmatprep.subr.mxu0 %v504
  %598 = vmatpush1.msra.mxu0 %v503
  %599 = vmatprep.subr.mxu0 0.0
  %600 = vmatpush2.msra.mxu0 0.0
  %601 = vmatprep.subr.mxu0 0.0
  %602 = vmatpush2.msra.mxu0 0.0
  %603 = vmatprep.subr.mxu0 0.0
  %604 = vmatpush2.msra.mxu0 0.0
  %605 = vmatprep.subr.mxu0 0.0
  %606 = vmatpush2.msra.mxu0 0.0
  %607 = vmatprep.subr.mxu0 0.0
  %608 = vmatpush2.msra.mxu0 0.0
  %609 = vmatprep.subr.mxu0 0.0
  %610 = vmatpush2.msra.mxu0 0.0
  %611 = vmatprep.subr.mxu0 0.0
  %612 = vmatpush2.msra.mxu0 0.0
  %613 = vmatprep.subr.mxu0 0.0
  %614 = vmatpush2.msra.mxu0 0.0
  %615 = vmatprep.subr.mxu0 0.0
  %616 = vmatpush2.msra.mxu0 0.0
  %617 = vmatprep.subr.mxu0 0.0
  %618 = vmatpush2.msra.mxu0 0.0
  %619 = vmatprep.subr.mxu0 0.0
  %620 = vmatpush2.msra.mxu0 0.0
  %621 = vmatprep.subr.mxu0 0.0
  %622 = vmatpush2.msra.mxu0 0.0
  %623 = vmatprep.subr.mxu0 0.0
  %624 = vmatpush2.msra.mxu0 0.0
  %625 = vmatprep.subr.mxu0 0.0
  %626 = vmatpush2.msra.mxu0 0.0
  %627 = vmatprep.subr.mxu0 0.0
  %628 = vmatpush2.msra.mxu0 0.0
  %629 = vmatprep.subr.mxu0 0.0
  %630 = vmatpush2.msra.mxu0 0.0
  %631 = vmatprep.mubr.f32.mxu0 0.0
  %632 = vmatmul.mubr.f32.gmra.mxu0 %v495
  %v633 = vpop.f32.mrf.mxu0
  %v634 = vadd.f32 0.0, %v633
  %v635 = vpop.f32.mrf.mxu0
  %v636 = vadd.f32 0.0, %v635
  %637 = vdwg.mxu0
  %638 = vmatprep.subr.mxu0 %v566
  %639 = vmatpush1.msra.mxu0 %v565
  %640 = vmatprep.subr.mxu0 %v562
  %641 = vmatpush1.msra.mxu0 %v561
  %642 = vmatprep.subr.mxu0 %v558
  %643 = vmatpush1.msra.mxu0 %v557
  %644 = vmatprep.subr.mxu0 %v554
  %645 = vmatpush1.msra.mxu0 %v553
  %646 = vmatprep.subr.mxu0 %v550
  %647 = vmatpush1.msra.mxu0 %v549
  %648 = vmatprep.subr.mxu0 %v546
  %649 = vmatpush1.msra.mxu0 %v545
  %650 = vmatprep.subr.mxu0 %v542
  %651 = vmatpush1.msra.mxu0 %v541
  %652 = vmatprep.subr.mxu0 %v538
  %653 = vmatpush1.msra.mxu0 %v537
  %654 = vmatprep.subr.mxu0 %v534
  %655 = vmatpush1.msra.mxu0 %v533
  %656 = vmatprep.subr.mxu0 %v530
  %657 = vmatpush1.msra.mxu0 %v529
  %658 = vmatprep.subr.mxu0 %v526
  %659 = vmatpush1.msra.mxu0 %v525
  %660 = vmatprep.subr.mxu0 %v522
  %661 = vmatpush1.msra.mxu0 %v521
  %662 = vmatprep.subr.mxu0 %v518
  %663 = vmatpush1.msra.mxu0 %v517
  %664 = vmatprep.subr.mxu0 %v514
  %665 = vmatpush1.msra.mxu0 %v513
  %666 = vmatprep.subr.mxu0 %v510
  %667 = vmatpush1.msra.mxu0 %v509
  %668 = vmatprep.subr.mxu0 %v506
  %669 = vmatpush1.msra.mxu0 %v505
  %670 = vmatprep.subr.mxu0 0.0
  %671 = vmatpush2.msra.mxu0 0.0
  %672 = vmatprep.subr.mxu0 0.0
  %673 = vmatpush2.msra.mxu0 0.0
  %674 = vmatprep.subr.mxu0 0.0
  %675 = vmatpush2.msra.mxu0 0.0
  %676 = vmatprep.subr.mxu0 0.0
  %677 = vmatpush2.msra.mxu0 0.0
  %678 = vmatprep.subr.mxu0 0.0
  %679 = vmatpush2.msra.mxu0 0.0
  %680 = vmatprep.subr.mxu0 0.0
  %681 = vmatpush2.msra.mxu0 0.0
  %682 = vmatprep.subr.mxu0 0.0
  %683 = vmatpush2.msra.mxu0 0.0
  %684 = vmatprep.subr.mxu0 0.0
  %685 = vmatpush2.msra.mxu0 0.0
  %686 = vmatprep.subr.mxu0 0.0
  %687 = vmatpush2.msra.mxu0 0.0
  %688 = vmatprep.subr.mxu0 0.0
  %689 = vmatpush2.msra.mxu0 0.0
  %690 = vmatprep.subr.mxu0 0.0
  %691 = vmatpush2.msra.mxu0 0.0
  %692 = vmatprep.subr.mxu0 0.0
  %693 = vmatpush2.msra.mxu0 0.0
  %694 = vmatprep.subr.mxu0 0.0
  %695 = vmatpush2.msra.mxu0 0.0
  %696 = vmatprep.subr.mxu0 0.0
  %697 = vmatpush2.msra.mxu0 0.0
  %698 = vmatprep.subr.mxu0 0.0
  %699 = vmatpush2.msra.mxu0 0.0
  %700 = vmatprep.subr.mxu0 0.0
  %701 = vmatpush2.msra.mxu0 0.0
  %702 = vmatprep.mubr.f32.mxu0 0.0
  %703 = vmatmul.mubr.f32.gmra.mxu0 %v495
  %v704 = vpop.f32.mrf.mxu0
  %v705 = vadd.f32 0.0, %v704
  %v706 = vpop.f32.mrf.mxu0
  %v707 = vadd.f32 0.0, %v706
  %708 = vdwg.mxu0
  %v709 = vadd.f32 %v499, %v634
  %v710 = vadd.f32 %v500, %v636
  %v711 = vadd.f32 %v501, %v705
  %v712 = vadd.f32 %v502, %v707
  %v713 = vmul.f32 %v709, 0.5
  %v714 = vtanh.pop %v713
  %v715 = vadd.f32 %v714, 1.0
  %v716 = vmul.f32 %v715, 0.5
  %v717 = vmul.f32 %v710, 0.5
  %v718 = vtanh.pop %v717
  %v719 = vadd.f32 %v718, 1.0
  %v720 = vmul.f32 %v719, 0.5
  %v721 = vtanh.pop %v711
  %v722 = vmul.f32 %v712, 0.5
  %v723 = vtanh.pop %v722
  %v724 = vadd.f32 %v723, 1.0
  %v725 = vmul.f32 %v724, 0.5
  %v726 = vmul.f32 %v720, %v493
  %v727 = vmul.f32 %v716, %v721
  %v728 = vadd.f32 %v726, %v727
  %v729 = vtanh.pop %v728
  %v730 = vmul.f32 %v725, %v729
  %s731 = scalar_lea.vmem %s4, 16
  %732 = vst [vmem:[%s731] sm:$0xff] %v730
  %s733 = scalar_lea.vmem %s0, 96
  %v734 = vld [vmem:[%s733] sm:$0xff]
  %v735 = vld [vmem:[%s733 + $0x8] sm:$0xff]
  %v736 = vld [vmem:[%s733 + $0x10] sm:$0xff]
  %v737 = vld [vmem:[%s733 + $0x18] sm:$0xff]
  %v738 = vld [vmem:[%s1] sm:$0xff]
  %v739 = vld [vmem:[%s1 + $0x8] sm:$0xff]
  %v740 = vld [vmem:[%s1 + $0x10] sm:$0xff]
  %v741 = vld [vmem:[%s1 + $0x18] sm:$0xff]
  %v742 = vld [vmem:[%s1 + $0x20] sm:$0xff]
  %v743 = vld [vmem:[%s1 + $0x28] sm:$0xff]
  %v744 = vld [vmem:[%s1 + $0x30] sm:$0xff]
  %v745 = vld [vmem:[%s1 + $0x38] sm:$0xff]
  %v746 = vld [vmem:[%s1 + $0x40] sm:$0xff]
  %v747 = vld [vmem:[%s1 + $0x48] sm:$0xff]
  %v748 = vld [vmem:[%s1 + $0x50] sm:$0xff]
  %v749 = vld [vmem:[%s1 + $0x58] sm:$0xff]
  %v750 = vld [vmem:[%s1 + $0x60] sm:$0xff]
  %v751 = vld [vmem:[%s1 + $0x68] sm:$0xff]
  %v752 = vld [vmem:[%s1 + $0x70] sm:$0xff]
  %v753 = vld [vmem:[%s1 + $0x78] sm:$0xff]
  %v754 = vld [vmem:[%s1 + $0x80] sm:$0xff]
  %v755 = vld [vmem:[%s1 + $0x88] sm:$0xff]
  %v756 = vld [vmem:[%s1 + $0x90] sm:$0xff]
  %v757 = vld [vmem:[%s1 + $0x98] sm:$0xff]
  %v758 = vld [vmem:[%s1 + $0xa0] sm:$0xff]
  %v759 = vld [vmem:[%s1 + $0xa8] sm:$0xff]
  %v760 = vld [vmem:[%s1 + $0xb0] sm:$0xff]
  %v761 = vld [vmem:[%s1 + $0xb8] sm:$0xff]
  %v762 = vld [vmem:[%s1 + $0xc0] sm:$0xff]
  %v763 = vld [vmem:[%s1 + $0xc8] sm:$0xff]
  %v764 = vld [vmem:[%s1 + $0xd0] sm:$0xff]
  %v765 = vld [vmem:[%s1 + $0xd8] sm:$0xff]
  %v766 = vld [vmem:[%s1 + $0xe0] sm:$0xff]
  %v767 = vld [vmem:[%s1 + $0xe8] sm:$0xff]
  %v768 = vld [vmem:[%s1 + $0xf0] sm:$0xff]
  %v769 = vld [vmem:[%s1 + $0xf8] sm:$0xff]
  %v770 = vld [vmem:[%s1 + $0x100] sm:$0xff]
  %v771 = vld [vmem:[%s1 + $0x108] sm:$0xff]
  %v772 = vld [vmem:[%s1 + $0x110] sm:$0xff]
  %v773 = vld [vmem:[%s1 + $0x118] sm:$0xff]
  %v774 = vld [vmem:[%s1 + $0x120] sm:$0xff]
  %v775 = vld [vmem:[%s1 + $0x128] sm:$0xff]
  %v776 = vld [vmem:[%s1 + $0x130] sm:$0xff]
  %v777 = vld [vmem:[%s1 + $0x138] sm:$0xff]
  %v778 = vld [vmem:[%s1 + $0x140] sm:$0xff]
  %v779 = vld [vmem:[%s1 + $0x148] sm:$0xff]
  %v780 = vld [vmem:[%s1 + $0x150] sm:$0xff]
  %v781 = vld [vmem:[%s1 + $0x158] sm:$0xff]
  %v782 = vld [vmem:[%s1 + $0x160] sm:$0xff]
  %v783 = vld [vmem:[%s1 + $0x168] sm:$0xff]
  %v784 = vld [vmem:[%s1 + $0x170] sm:$0xff]
  %v785 = vld [vmem:[%s1 + $0x178] sm:$0xff]
  %v786 = vld [vmem:[%s1 + $0x180] sm:$0xff]
  %v787 = vld [vmem:[%s1 + $0x188] sm:$0xff]
  %v788 = vld [vmem:[%s1 + $0x190] sm:$0xff]
  %v789 = vld [vmem:[%s1 + $0x198] sm:$0xff]
  %v790 = vld [vmem:[%s1 + $0x1a0] sm:$0xff]
  %v791 = vld [vmem:[%s1 + $0x1a8] sm:$0xff]
  %v792 = vld [vmem:[%s1 + $0x1b0] sm:$0xff]
  %v793 = vld [vmem:[%s1 + $0x1b8] sm:$0xff]
  %v794 = vld [vmem:[%s1 + $0x1c0] sm:$0xff]
  %v795 = vld [vmem:[%s1 + $0x1c8] sm:$0xff]
  %v796 = vld [vmem:[%s1 + $0x1d0] sm:$0xff]
  %v797 = vld [vmem:[%s1 + $0x1d8] sm:$0xff]
  %v798 = vld [vmem:[%s1 + $0x1e0] sm:$0xff]
  %v799 = vld [vmem:[%s1 + $0x1e8] sm:$0xff]
  %v800 = vld [vmem:[%s1 + $0x1f0] sm:$0xff]
  %v801 = vld [vmem:[%s1 + $0x1f8] sm:$0xff]
  %802 = vmatprep.subr.mxu0 %v799
  %803 = vmatpush1.msra.mxu0 %v798
  %804 = vmatprep.subr.mxu0 %v795
  %805 = vmatpush1.msra.mxu0 %v794
  %806 = vmatprep.subr.mxu0 %v791
  %807 = vmatpush1.msra.mxu0 %v790
  %808 = vmatprep.subr.mxu0 %v787
  %809 = vmatpush1.msra.mxu0 %v786
  %810 = vmatprep.subr.mxu0 %v783
  %811 = vmatpush1.msra.mxu0 %v782
  %812 = vmatprep.subr.mxu0 %v779
  %813 = vmatpush1.msra.mxu0 %v778
  %814 = vmatprep.subr.mxu0 %v775
  %815 = vmatpush1.msra.mxu0 %v774
  %816 = vmatprep.subr.mxu0 %v771
  %817 = vmatpush1.msra.mxu0 %v770
  %818 = vmatprep.subr.mxu0 %v767
  %819 = vmatpush1.msra.mxu0 %v766
  %820 = vmatprep.subr.mxu0 %v763
  %821 = vmatpush1.msra.mxu0 %v762
  %822 = vmatprep.subr.mxu0 %v759
  %823 = vmatpush1.msra.mxu0 %v758
  %824 = vmatprep.subr.mxu0 %v755
  %825 = vmatpush1.msra.mxu0 %v754
  %826 = vmatprep.subr.mxu0 %v751
  %827 = vmatpush1.msra.mxu0 %v750
  %828 = vmatprep.subr.mxu0 %v747
  %829 = vmatpush1.msra.mxu0 %v746
  %830 = vmatprep.subr.mxu0 %v743
  %831 = vmatpush1.msra.mxu0 %v742
  %832 = vmatprep.subr.mxu0 %v739
  %833 = vmatpush1.msra.mxu0 %v738
  %834 = vmatprep.subr.mxu0 0.0
  %835 = vmatpush2.msra.mxu0 0.0
  %836 = vmatprep.subr.mxu0 0.0
  %837 = vmatpush2.msra.mxu0 0.0
  %838 = vmatprep.subr.mxu0 0.0
  %839 = vmatpush2.msra.mxu0 0.0
  %840 = vmatprep.subr.mxu0 0.0
  %841 = vmatpush2.msra.mxu0 0.0
  %842 = vmatprep.subr.mxu0 0.0
  %843 = vmatpush2.msra.mxu0 0.0
  %844 = vmatprep.subr.mxu0 0.0
  %845 = vmatpush2.msra.mxu0 0.0
  %846 = vmatprep.subr.mxu0 0.0
  %847 = vmatpush2.msra.mxu0 0.0
  %848 = vmatprep.subr.mxu0 0.0
  %849 = vmatpush2.msra.mxu0 0.0
  %850 = vmatprep.subr.mxu0 0.0
  %851 = vmatpush2.msra.mxu0 0.0
  %852 = vmatprep.subr.mxu0 0.0
  %853 = vmatpush2.msra.mxu0 0.0
  %854 = vmatprep.subr.mxu0 0.0
  %855 = vmatpush2.msra.mxu0 0.0
  %856 = vmatprep.subr.mxu0 0.0
  %857 = vmatpush2.msra.mxu0 0.0
  %858 = vmatprep.subr.mxu0 0.0
  %859 = vmatpush2.msra.mxu0 0.0
  %860 = vmatprep.subr.mxu0 0.0
  %861 = vmatpush2.msra.mxu0 0.0
  %862 = vmatprep.subr.mxu0 0.0
  %863 = vmatpush2.msra.mxu0 0.0
  %864 = vmatprep.subr.mxu0 0.0
  %865 = vmatpush2.msra.mxu0 0.0
  %866 = vmatprep.mubr.f32.mxu0 0.0
  %867 = vmatmul.mubr.f32.gmra.mxu0 %v730
  %v868 = vpop.f32.mrf.mxu0
  %v869 = vadd.f32 0.0, %v868
  %v870 = vpop.f32.mrf.mxu0
  %v871 = vadd.f32 0.0, %v870
  %872 = vdwg.mxu0
  %873 = vmatprep.subr.mxu0 %v801
  %874 = vmatpush1.msra.mxu0 %v800
  %875 = vmatprep.subr.mxu0 %v797
  %876 = vmatpush1.msra.mxu0 %v796
  %877 = vmatprep.subr.mxu0 %v793
  %878 = vmatpush1.msra.mxu0 %v792
  %879 = vmatprep.subr.mxu0 %v789
  %880 = vmatpush1.msra.mxu0 %v788
  %881 = vmatprep.subr.mxu0 %v785
  %882 = vmatpush1.msra.mxu0 %v784
  %883 = vmatprep.subr.mxu0 %v781
  %884 = vmatpush1.msra.mxu0 %v780
  %885 = vmatprep.subr.mxu0 %v777
  %886 = vmatpush1.msra.mxu0 %v776
  %887 = vmatprep.subr.mxu0 %v773
  %888 = vmatpush1.msra.mxu0 %v772
  %889 = vmatprep.subr.mxu0 %v769
  %890 = vmatpush1.msra.mxu0 %v768
  %891 = vmatprep.subr.mxu0 %v765
  %892 = vmatpush1.msra.mxu0 %v764
  %893 = vmatprep.subr.mxu0 %v761
  %894 = vmatpush1.msra.mxu0 %v760
  %895 = vmatprep.subr.mxu0 %v757
  %896 = vmatpush1.msra.mxu0 %v756
  %897 = vmatprep.subr.mxu0 %v753
  %898 = vmatpush1.msra.mxu0 %v752
  %899 = vmatprep.subr.mxu0 %v749
  %900 = vmatpush1.msra.mxu0 %v748
  %901 = vmatprep.subr.mxu0 %v745
  %902 = vmatpush1.msra.mxu0 %v744
  %903 = vmatprep.subr.mxu0 %v741
  %904 = vmatpush1.msra.mxu0 %v740
  %905 = vmatprep.subr.mxu0 0.0
  %906 = vmatpush2.msra.mxu0 0.0
  %907 = vmatprep.subr.mxu0 0.0
  %908 = vmatpush2.msra.mxu0 0.0
  %909 = vmatprep.subr.mxu0 0.0
  %910 = vmatpush2.msra.mxu0 0.0
  %911 = vmatprep.subr.mxu0 0.0
  %912 = vmatpush2.msra.mxu0 0.0
  %913 = vmatprep.subr.mxu0 0.0
  %914 = vmatpush2.msra.mxu0 0.0
  %915 = vmatprep.subr.mxu0 0.0
  %916 = vmatpush2.msra.mxu0 0.0
  %917 = vmatprep.subr.mxu0 0.0
  %918 = vmatpush2.msra.mxu0 0.0
  %919 = vmatprep.subr.mxu0 0.0
  %920 = vmatpush2.msra.mxu0 0.0
  %921 = vmatprep.subr.mxu0 0.0
  %922 = vmatpush2.msra.mxu0 0.0
  %923 = vmatprep.subr.mxu0 0.0
  %924 = vmatpush2.msra.mxu0 0.0
  %925 = vmatprep.subr.mxu0 0.0
  %926 = vmatpush2.msra.mxu0 0.0
  %927 = vmatprep.subr.mxu0 0.0
  %928 = vmatpush2.msra.mxu0 0.0
  %929 = vmatprep.subr.mxu0 0.0
  %930 = vmatpush2.msra.mxu0 0.0
  %931 = vmatprep.subr.mxu0 0.0
  %932 = vmatpush2.msra.mxu0 0.0
  %933 = vmatprep.subr.mxu0 0.0
  %934 = vmatpush2.msra.mxu0 0.0
  %935 = vmatprep.subr.mxu0 0.0
  %936 = vmatpush2.msra.mxu0 0.0
  %937 = vmatprep.mubr.f32.mxu0 0.0
  %938 = vmatmul.mubr.f32.gmra.mxu0 %v730
  %v939 = vpop.f32.mrf.mxu0
  %v940 = vadd.f32 0.0, %v939
  %v941 = vpop.f32.mrf.mxu0
  %v942 = vadd.f32 0.0, %v941
  %943 = vdwg.mxu0
  %v944 = vadd.f32 %v734, %v869
  %v945 = vadd.f32 %v735, %v871
  %v946 = vadd.f32 %v736, %v940
  %v947 = vadd.f32 %v737, %v942
  %v948 = vmul.f32 %v944, 0.5
  %v949 = vtanh.pop %v948
  %v950 = vadd.f32 %v949, 1.0
  %v951 = vmul.f32 %v950, 0.5
  %v952 = vmul.f32 %v945, 0.5
  %v953 = vtanh.pop %v952
  %v954 = vadd.f32 %v953, 1.0
  %v955 = vmul.f32 %v954, 0.5
  %v956 = vtanh.pop %v946
  %v957 = vmul.f32 %v947, 0.5
  %v958 = vtanh.pop %v957
  %v959 = vadd.f32 %v958, 1.0
  %v960 = vmul.f32 %v959, 0.5
  %v961 = vmul.f32 %v955, %v728
  %v962 = vmul.f32 %v951, %v956
  %v963 = vadd.f32 %v961, %v962
  %v964 = vtanh.pop %v963
  %v965 = vmul.f32 %v960, %v964
  %s966 = scalar_lea.vmem %s4, 24
  %967 = vst [vmem:[%s966] sm:$0xff] %v965
  %s968 = scalar_lea.vmem %s0, 128
  %v969 = vld [vmem:[%s968] sm:$0xff]
  %v970 = vld [vmem:[%s968 + $0x8] sm:$0xff]
  %v971 = vld [vmem:[%s968 + $0x10] sm:$0xff]
  %v972 = vld [vmem:[%s968 + $0x18] sm:$0xff]
  %v973 = vld [vmem:[%s1] sm:$0xff]
  %v974 = vld [vmem:[%s1 + $0x8] sm:$0xff]
  %v975 = vld [vmem:[%s1 + $0x10] sm:$0xff]
  %v976 = vld [vmem:[%s1 + $0x18] sm:$0xff]
  %v977 = vld [vmem:[%s1 + $0x20] sm:$0xff]
  %v978 = vld [vmem:[%s1 + $0x28] sm:$0xff]
  %v979 = vld [vmem:[%s1 + $0x30] sm:$0xff]
  %v980 = vld [vmem:[%s1 + $0x38] sm:$0xff]
  %v981 = vld [vmem:[%s1 + $0x40] sm:$0xff]
  %v982 = vld [vmem:[%s1 + $0x48] sm:$0xff]
  %v983 = vld [vmem:[%s1 + $0x50] sm:$0xff]
  %v984 = vld [vmem:[%s1 + $0x58] sm:$0xff]
  %v985 = vld [vmem:[%s1 + $0x60] sm:$0xff]
  %v986 = vld [vmem:[%s1 + $0x68] sm:$0xff]
  %v987 = vld [vmem:[%s1 + $0x70] sm:$0xff]
  %v988 = vld [vmem:[%s1 + $0x78] sm:$0xff]
  %v989 = vld [vmem:[%s1 + $0x80] sm:$0xff]
  %v990 = vld [vmem:[%s1 + $0x88] sm:$0xff]
  %v991 = vld [vmem:[%s1 + $0x90] sm:$0xff]
  %v992 = vld [vmem:[%s1 + $0x98] sm:$0xff]
  %v993 = vld [vmem:[%s1 + $0xa0] sm:$0xff]
  %v994 = vld [vmem:[%s1 + $0xa8] sm:$0xff]
  %v995 = vld [vmem:[%s1 + $0xb0] sm:$0xff]
  %v996 = vld [vmem:[%s1 + $0xb8] sm:$0xff]
  %v997 = vld [vmem:[%s1 + $0xc0] sm:$0xff]
  %v998 = vld [vmem:[%s1 + $0xc8] sm:$0xff]
  %v999 = vld [vmem:[%s1 + $0xd0] sm:$0xff]
  %v1000 = vld [vmem:[%s1 + $0xd8] sm:$0xff]
  %v1001 = vld [vmem:[%s1 + $0xe0] sm:$0xff]
  %v1002 = vld [vmem:[%s1 + $0xe8] sm:$0xff]
  %v1003 = vld [vmem:[%s1 + $0xf0] sm:$0xff]
  %v1004 = vld [vmem:[%s1 + $0xf8] sm:$0xff]
  %v1005 = vld [vmem:[%s1 + $0x100] sm:$0xff]
  %v1006 = vld [vmem:[%s1 + $0x108] sm:$0xff]
  %v1007 = vld [vmem:[%s1 + $0x110] sm:$0xff]
  %v1008 = vld [vmem:[%s1 + $0x118] sm:$0xff]
  %v1009 = vld [vmem:[%s1 + $0x120] sm:$0xff]
  %v1010 = vld [vmem:[%s1 + $0x128] sm:$0xff]
  %v1011 = vld [vmem:[%s1 + $0x130] sm:$0xff]
  %v1012 = vld [vmem:[%s1 + $0x138] sm:$0xff]
  %v1013 = vld [vmem:[%s1 + $0x140] sm:$0xff]
  %v1014 = vld [vmem:[%s1 + $0x148] sm:$0xff]
  %v1015 = vld [vmem:[%s1 + $0x150] sm:$0xff]
  %v1016 = vld [vmem:[%s1 + $0x158] sm:$0xff]
  %v1017 = vld [vmem:[%s1 + $0x160] sm:$0xff]
  %v1018 = vld [vmem:[%s1 + $0x168] sm:$0xff]
  %v1019 = vld [vmem:[%s1 + $0x170] sm:$0xff]
  %v1020 = vld [vmem:[%s1 + $0x178] sm:$0xff]
  %v1021 = vld [vmem:[%s1 + $0x180] sm:$0xff]
  %v1022 = vld [vmem:[%s1 + $0x188] sm:$0xff]
  %v1023 = vld [vmem:[%s1 + $0x190] sm:$0xff]
  %v1024 = vld [vmem:[%s1 + $0x198] sm:$0xff]
  %v1025 = vld [vmem:[%s1 + $0x1a0] sm:$0xff]
  %v1026 = vld [vmem:[%s1 + $0x1a8] sm:$0xff]
  %v1027 = vld [vmem:[%s1 + $0x1b0] sm:$0xff]
  %v1028 = vld [vmem:[%s1 + $0x1b8] sm:$0xff]
  %v1029 = vld [vmem:[%s1 + $0x1c0] sm:$0xff]
  %v1030 = vld [vmem:[%s1 + $0x1c8] sm:$0xff]
  %v1031 = vld [vmem:[%s1 + $0x1d0] sm:$0xff]
  %v1032 = vld [vmem:[%s1 + $0x1d8] sm:$0xff]
  %v1033 = vld [vmem:[%s1 + $0x1e0] sm:$0xff]
  %v1034 = vld [vmem:[%s1 + $0x1e8] sm:$0xff]
  %v1035 = vld [vmem:[%s1 + $0x1f0] sm:$0xff]
  %v1036 = vld [vmem:[%s1 + $0x1f8] sm:$0xff]
  %1037 = vmatprep.subr.mxu0 %v1034
  %1038 = vmatpush1.msra.mxu0 %v1033
  %1039 = vmatprep.subr.mxu0 %v1030
  %1040 = vmatpush1.msra.mxu0 %v1029
  %1041 = vmatprep.subr.mxu0 %v1026
  %1042 = vmatpush1.msra.mxu0 %v1025
  %1043 = vmatprep.subr.mxu0 %v1022
  %1044 = vmatpush1.msra.mxu0 %v1021
  %1045 = vmatprep.subr.mxu0 %v1018
  %1046 = vmatpush1.msra.mxu0 %v1017
  %1047 = vmatprep.subr.mxu0 %v1014
  %1048 = vmatpush1.msra.mxu0 %v1013
  %1049 = vmatprep.subr.mxu0 %v1010
  %1050 = vmatpush1.msra.mxu0 %v1009
  %1051 = vmatprep.subr.mxu0 %v1006
  %1052 = vmatpush1.msra.mxu0 %v1005
  %1053 = vmatprep.subr.mxu0 %v1002
  %1054 = vmatpush1.msra.mxu0 %v1001
  %1055 = vmatprep.subr.mxu0 %v998
  %1056 = vmatpush1.msra.mxu0 %v997
  %1057 = vmatprep.subr.mxu0 %v994
  %1058 = vmatpush1.msra.mxu0 %v993
  %1059 = vmatprep.subr.mxu0 %v990
  %1060 = vmatpush1.msra.mxu0 %v989
  %1061 = vmatprep.subr.mxu0 %v986
  %1062 = vmatpush1.msra.mxu0 %v985
  %1063 = vmatprep.subr.mxu0 %v982
  %1064 = vmatpush1.msra.mxu0 %v981
  %1065 = vmatprep.subr.mxu0 %v978
  %1066 = vmatpush1.msra.mxu0 %v977
  %1067 = vmatprep.subr.mxu0 %v974
  %1068 = vmatpush1.msra.mxu0 %v973
  %1069 = vmatprep.subr.mxu0 0.0
  %1070 = vmatpush2.msra.mxu0 0.0
  %1071 = vmatprep.subr.mxu0 0.0
  %1072 = vmatpush2.msra.mxu0 0.0
  %1073 = vmatprep.subr.mxu0 0.0
  %1074 = vmatpush2.msra.mxu0 0.0
  %1075 = vmatprep.subr.mxu0 0.0
  %1076 = vmatpush2.msra.mxu0 0.0
  %1077 = vmatprep.subr.mxu0 0.0
  %1078 = vmatpush2.msra.mxu0 0.0
  %1079 = vmatprep.subr.mxu0 0.0
  %1080 = vmatpush2.msra.mxu0 0.0
  %1081 = vmatprep.subr.mxu0 0.0
  %1082 = vmatpush2.msra.mxu0 0.0
  %1083 = vmatprep.subr.mxu0 0.0
  %1084 = vmatpush2.msra.mxu0 0.0
  %1085 = vmatprep.subr.mxu0 0.0
  %1086 = vmatpush2.msra.mxu0 0.0
  %1087 = vmatprep.subr.mxu0 0.0
  %1088 = vmatpush2.msra.mxu0 0.0
  %1089 = vmatprep.subr.mxu0 0.0
  %1090 = vmatpush2.msra.mxu0 0.0
  %1091 = vmatprep.subr.mxu0 0.0
  %1092 = vmatpush2.msra.mxu0 0.0
  %1093 = vmatprep.subr.mxu0 0.0
  %1094 = vmatpush2.msra.mxu0 0.0
  %1095 = vmatprep.subr.mxu0 0.0
  %1096 = vmatpush2.msra.mxu0 0.0
  %1097 = vmatprep.subr.mxu0 0.0
  %1098 = vmatpush2.msra.mxu0 0.0
  %1099 = vmatprep.subr.mxu0 0.0
  %1100 = vmatpush2.msra.mxu0 0.0
  %1101 = vmatprep.mubr.f32.mxu0 0.0
  %1102 = vmatmul.mubr.f32.gmra.mxu0 %v965
  %v1103 = vpop.f32.mrf.mxu0
  %v1104 = vadd.f32 0.0, %v1103
  %v1105 = vpop.f32.mrf.mxu0
  %v1106 = vadd.f32 0.0, %v1105
  %1107 = vdwg.mxu0
  %1108 = vmatprep.subr.mxu0 %v1036
  %1109 = vmatpush1.msra.mxu0 %v1035
  %1110 = vmatprep.subr.mxu0 %v1032
  %1111 = vmatpush1.msra.mxu0 %v1031
  %1112 = vmatprep.subr.mxu0 %v1028
  %1113 = vmatpush1.msra.mxu0 %v1027
  %1114 = vmatprep.subr.mxu0 %v1024
  %1115 = vmatpush1.msra.mxu0 %v1023
  %1116 = vmatprep.subr.mxu0 %v1020
  %1117 = vmatpush1.msra.mxu0 %v1019
  %1118 = vmatprep.subr.mxu0 %v1016
  %1119 = vmatpush1.msra.mxu0 %v1015
  %1120 = vmatprep.subr.mxu0 %v1012
  %1121 = vmatpush1.msra.mxu0 %v1011
  %1122 = vmatprep.subr.mxu0 %v1008
  %1123 = vmatpush1.msra.mxu0 %v1007
  %1124 = vmatprep.subr.mxu0 %v1004
  %1125 = vmatpush1.msra.mxu0 %v1003
  %1126 = vmatprep.subr.mxu0 %v1000
  %1127 = vmatpush1.msra.mxu0 %v999
  %1128 = vmatprep.subr.mxu0 %v996
  %1129 = vmatpush1.msra.mxu0 %v995
  %1130 = vmatprep.subr.mxu0 %v992
  %1131 = vmatpush1.msra.mxu0 %v991
  %1132 = vmatprep.subr.mxu0 %v988
  %1133 = vmatpush1.msra.mxu0 %v987
  %1134 = vmatprep.subr.mxu0 %v984
  %1135 = vmatpush1.msra.mxu0 %v983
  %1136 = vmatprep.subr.mxu0 %v980
  %1137 = vmatpush1.msra.mxu0 %v979
  %1138 = vmatprep.subr.mxu0 %v976
  %1139 = vmatpush1.msra.mxu0 %v975
  %1140 = vmatprep.subr.mxu0 0.0
  %1141 = vmatpush2.msra.mxu0 0.0
  %1142 = vmatprep.subr.mxu0 0.0
  %1143 = vmatpush2.msra.mxu0 0.0
  %1144 = vmatprep.subr.mxu0 0.0
  %1145 = vmatpush2.msra.mxu0 0.0
  %1146 = vmatprep.subr.mxu0 0.0
  %1147 = vmatpush2.msra.mxu0 0.0
  %1148 = vmatprep.subr.mxu0 0.0
  %1149 = vmatpush2.msra.mxu0 0.0
  %1150 = vmatprep.subr.mxu0 0.0
  %1151 = vmatpush2.msra.mxu0 0.0
  %1152 = vmatprep.subr.mxu0 0.0
  %1153 = vmatpush2.msra.mxu0 0.0
  %1154 = vmatprep.subr.mxu0 0.0
  %1155 = vmatpush2.msra.mxu0 0.0
  %1156 = vmatprep.subr.mxu0 0.0
  %1157 = vmatpush2.msra.mxu0 0.0
  %1158 = vmatprep.subr.mxu0 0.0
  %1159 = vmatpush2.msra.mxu0 0.0
  %1160 = vmatprep.subr.mxu0 0.0
  %1161 = vmatpush2.msra.mxu0 0.0
  %1162 = vmatprep.subr.mxu0 0.0
  %1163 = vmatpush2.msra.mxu0 0.0
  %1164 = vmatprep.subr.mxu0 0.0
  %1165 = vmatpush2.msra.mxu0 0.0
  %1166 = vmatprep.subr.mxu0 0.0
  %1167 = vmatpush2.msra.mxu0 0.0
  %1168 = vmatprep.subr.mxu0 0.0
  %1169 = vmatpush2.msra.mxu0 0.0
  %1170 = vmatprep.subr.mxu0 0.0
  %1171 = vmatpush2.msra.mxu0 0.0
  %1172 = vmatprep.mubr.f32.mxu0 0.0
  %1173 = vmatmul.mubr.f32.gmra.mxu0 %v965
  %v1174 = vpop.f32.mrf.mxu0
  %v1175 = vadd.f32 0.0, %v1174
  %v1176 = vpop.f32.mrf.mxu0
  %v1177 = vadd.f32 0.0, %v1176
  %1178 = vdwg.mxu0
  %v1179 = vadd.f32 %v969, %v1104
  %v1180 = vadd.f32 %v970, %v1106
  %v1181 = vadd.f32 %v971, %v1175
  %v1182 = vadd.f32 %v972, %v1177
  %v1183 = vmul.f32 %v1179, 0.5
  %v1184 = vtanh.pop %v1183
  %v1185 = vadd.f32 %v1184, 1.0
  %v1186 = vmul.f32 %v1185, 0.5
  %v1187 = vmul.f32 %v1180, 0.5
  %v1188 = vtanh.pop %v1187
  %v1189 = vadd.f32 %v1188, 1.0
  %v1190 = vmul.f32 %v1189, 0.5
  %v1191 = vtanh.pop %v1181
  %v1192 = vmul.f32 %v1182, 0.5
  %v1193 = vtanh.pop %v1192
  %v1194 = vadd.f32 %v1193, 1.0
  %v1195 = vmul.f32 %v1194, 0.5
  %v1196 = vmul.f32 %v1190, %v963
  %v1197 = vmul.f32 %v1186, %v1191
  %v1198 = vadd.f32 %v1196, %v1197
  %v1199 = vtanh.pop %v1198
  %v1200 = vmul.f32 %v1195, %v1199
  %s1201 = scalar_lea.vmem %s4, 32
  %1202 = vst [vmem:[%s1201] sm:$0xff] %v1200
  %s1203 = scalar_lea.vmem %s0, 160
  %v1204 = vld [vmem:[%s1203] sm:$0xff]
  %v1205 = vld [vmem:[%s1203 + $0x8] sm:$0xff]
  %v1206 = vld [vmem:[%s1203 + $0x10] sm:$0xff]
  %v1207 = vld [vmem:[%s1203 + $0x18] sm:$0xff]
  %v1208 = vld [vmem:[%s1] sm:$0xff]
  %v1209 = vld [vmem:[%s1 + $0x8] sm:$0xff]
  %v1210 = vld [vmem:[%s1 + $0x10] sm:$0xff]
  %v1211 = vld [vmem:[%s1 + $0x18] sm:$0xff]
  %v1212 = vld [vmem:[%s1 + $0x20] sm:$0xff]
  %v1213 = vld [vmem:[%s1 + $0x28] sm:$0xff]
  %v1214 = vld [vmem:[%s1 + $0x30] sm:$0xff]
  %v1215 = vld [vmem:[%s1 + $0x38] sm:$0xff]
  %v1216 = vld [vmem:[%s1 + $0x40] sm:$0xff]
  %v1217 = vld [vmem:[%s1 + $0x48] sm:$0xff]
  %v1218 = vld [vmem:[%s1 + $0x50] sm:$0xff]
  %v1219 = vld [vmem:[%s1 + $0x58] sm:$0xff]
  %v1220 = vld [vmem:[%s1 + $0x60] sm:$0xff]
  %v1221 = vld [vmem:[%s1 + $0x68] sm:$0xff]
  %v1222 = vld [vmem:[%s1 + $0x70] sm:$0xff]
  %v1223 = vld [vmem:[%s1 + $0x78] sm:$0xff]
  %v1224 = vld [vmem:[%s1 + $0x80] sm:$0xff]
  %v1225 = vld [vmem:[%s1 + $0x88] sm:$0xff]
  %v1226 = vld [vmem:[%s1 + $0x90] sm:$0xff]
  %v1227 = vld [vmem:[%s1 + $0x98] sm:$0xff]
  %v1228 = vld [vmem:[%s1 + $0xa0] sm:$0xff]
  %v1229 = vld [vmem:[%s1 + $0xa8] sm:$0xff]
  %v1230 = vld [vmem:[%s1 + $0xb0] sm:$0xff]
  %v1231 = vld [vmem:[%s1 + $0xb8] sm:$0xff]
  %v1232 = vld [vmem:[%s1 + $0xc0] sm:$0xff]
  %v1233 = vld [vmem:[%s1 + $0xc8] sm:$0xff]
  %v1234 = vld [vmem:[%s1 + $0xd0] sm:$0xff]
  %v1235 = vld [vmem:[%s1 + $0xd8] sm:$0xff]
  %v1236 = vld [vmem:[%s1 + $0xe0] sm:$0xff]
  %v1237 = vld [vmem:[%s1 + $0xe8] sm:$0xff]
  %v1238 = vld [vmem:[%s1 + $0xf0] sm:$0xff]
  %v1239 = vld [vmem:[%s1 + $0xf8] sm:$0xff]
  %v1240 = vld [vmem:[%s1 + $0x100] sm:$0xff]
  %v1241 = vld [vmem:[%s1 + $0x108] sm:$0xff]
  %v1242 = vld [vmem:[%s1 + $0x110] sm:$0xff]
  %v1243 = vld [vmem:[%s1 + $0x118] sm:$0xff]
  %v1244 = vld [vmem:[%s1 + $0x120] sm:$0xff]
  %v1245 = vld [vmem:[%s1 + $0x128] sm:$0xff]
  %v1246 = vld [vmem:[%s1 + $0x130] sm:$0xff]
  %v1247 = vld [vmem:[%s1 + $0x138] sm:$0xff]
  %v1248 = vld [vmem:[%s1 + $0x140] sm:$0xff]
  %v1249 = vld [vmem:[%s1 + $0x148] sm:$0xff]
  %v1250 = vld [vmem:[%s1 + $0x150] sm:$0xff]
  %v1251 = vld [vmem:[%s1 + $0x158] sm:$0xff]
  %v1252 = vld [vmem:[%s1 + $0x160] sm:$0xff]
  %v1253 = vld [vmem:[%s1 + $0x168] sm:$0xff]
  %v1254 = vld [vmem:[%s1 + $0x170] sm:$0xff]
  %v1255 = vld [vmem:[%s1 + $0x178] sm:$0xff]
  %v1256 = vld [vmem:[%s1 + $0x180] sm:$0xff]
  %v1257 = vld [vmem:[%s1 + $0x188] sm:$0xff]
  %v1258 = vld [vmem:[%s1 + $0x190] sm:$0xff]
  %v1259 = vld [vmem:[%s1 + $0x198] sm:$0xff]
  %v1260 = vld [vmem:[%s1 + $0x1a0] sm:$0xff]
  %v1261 = vld [vmem:[%s1 + $0x1a8] sm:$0xff]
  %v1262 = vld [vmem:[%s1 + $0x1b0] sm:$0xff]
  %v1263 = vld [vmem:[%s1 + $0x1b8] sm:$0xff]
  %v1264 = vld [vmem:[%s1 + $0x1c0] sm:$0xff]
  %v1265 = vld [vmem:[%s1 + $0x1c8] sm:$0xff]
  %v1266 = vld [vmem:[%s1 + $0x1d0] sm:$0xff]
  %v1267 = vld [vmem:[%s1 + $0x1d8] sm:$0xff]
  %v1268 = vld [vmem:[%s1 + $0x1e0] sm:$0xff]
  %v1269 = vld [vmem:[%s1 + $0x1e8] sm:$0xff]
  %v1270 = vld [vmem:[%s1 + $0x1f0] sm:$0xff]
  %v1271 = vld [vmem:[%s1 + $0x1f8] sm:$0xff]
  %1272 = vmatprep.subr.mxu0 %v1269
  %1273 = vmatpush1.msra.mxu0 %v1268
  %1274 = vmatprep.subr.mxu0 %v1265
  %1275 = vmatpush1.msra.mxu0 %v1264
  %1276 = vmatprep.subr.mxu0 %v1261
  %1277 = vmatpush1.msra.mxu0 %v1260
  %1278 = vmatprep.subr.mxu0 %v1257
  %1279 = vmatpush1.msra.mxu0 %v1256
  %1280 = vmatprep.subr.mxu0 %v1253
  %1281 = vmatpush1.msra.mxu0 %v1252
  %1282 = vmatprep.subr.mxu0 %v1249
  %1283 = vmatpush1.msra.mxu0 %v1248
  %1284 = vmatprep.subr.mxu0 %v1245
  %1285 = vmatpush1.msra.mxu0 %v1244
  %1286 = vmatprep.subr.mxu0 %v1241
  %1287 = vmatpush1.msra.mxu0 %v1240
  %1288 = vmatprep.subr.mxu0 %v1237
  %1289 = vmatpush1.msra.mxu0 %v1236
  %1290 = vmatprep.subr.mxu0 %v1233
  %1291 = vmatpush1.msra.mxu0 %v1232
  %1292 = vmatprep.subr.mxu0 %v1229
  %1293 = vmatpush1.msra.mxu0 %v1228
  %1294 = vmatprep.subr.mxu0 %v1225
  %1295 = vmatpush1.msra.mxu0 %v1224
  %1296 = vmatprep.subr.mxu0 %v1221
  %1297 = vmatpush1.msra.mxu0 %v1220
  %1298 = vmatprep.subr.mxu0 %v1217
  %1299 = vmatpush1.msra.mxu0 %v1216
  %1300 = vmatprep.subr.mxu0 %v1213
  %1301 = vmatpush1.msra.mxu0 %v1212
  %1302 = vmatprep.subr.mxu0 %v1209
  %1303 = vmatpush1.msra.mxu0 %v1208
  %1304 = vmatprep.subr.mxu0 0.0
  %1305 = vmatpush2.msra.mxu0 0.0
  %1306 = vmatprep.subr.mxu0 0.0
  %1307 = vmatpush2.msra.mxu0 0.0
  %1308 = vmatprep.subr.mxu0 0.0
  %1309 = vmatpush2.msra.mxu0 0.0
  %1310 = vmatprep.subr.mxu0 0.0
  %1311 = vmatpush2.msra.mxu0 0.0
  %1312 = vmatprep.subr.mxu0 0.0
  %1313 = vmatpush2.msra.mxu0 0.0
  %1314 = vmatprep.subr.mxu0 0.0
  %1315 = vmatpush2.msra.mxu0 0.0
  %1316 = vmatprep.subr.mxu0 0.0
  %1317 = vmatpush2.msra.mxu0 0.0
  %1318 = vmatprep.subr.mxu0 0.0
  %1319 = vmatpush2.msra.mxu0 0.0
  %1320 = vmatprep.subr.mxu0 0.0
  %1321 = vmatpush2.msra.mxu0 0.0
  %1322 = vmatprep.subr.mxu0 0.0
  %1323 = vmatpush2.msra.mxu0 0.0
  %1324 = vmatprep.subr.mxu0 0.0
  %1325 = vmatpush2.msra.mxu0 0.0
  %1326 = vmatprep.subr.mxu0 0.0
  %1327 = vmatpush2.msra.mxu0 0.0
  %1328 = vmatprep.subr.mxu0 0.0
  %1329 = vmatpush2.msra.mxu0 0.0
  %1330 = vmatprep.subr.mxu0 0.0
  %1331 = vmatpush2.msra.mxu0 0.0
  %1332 = vmatprep.subr.mxu0 0.0
  %1333 = vmatpush2.msra.mxu0 0.0
  %1334 = vmatprep.subr.mxu0 0.0
  %1335 = vmatpush2.msra.mxu0 0.0
  %1336 = vmatprep.mubr.f32.mxu0 0.0
  %1337 = vmatmul.mubr.f32.gmra.mxu0 %v1200
  %v1338 = vpop.f32.mrf.mxu0
  %v1339 = vadd.f32 0.0, %v1338
  %v1340 = vpop.f32.mrf.mxu0
  %v1341 = vadd.f32 0.0, %v1340
  %1342 = vdwg.mxu0
  %1343 = vmatprep.subr.mxu0 %v1271
  %1344 = vmatpush1.msra.mxu0 %v1270
  %1345 = vmatprep.subr.mxu0 %v1267
  %1346 = vmatpush1.msra.mxu0 %v1266
  %1347 = vmatprep.subr.mxu0 %v1263
  %1348 = vmatpush1.msra.mxu0 %v1262
  %1349 = vmatprep.subr.mxu0 %v1259
  %1350 = vmatpush1.msra.mxu0 %v1258
  %1351 = vmatprep.subr.mxu0 %v1255
  %1352 = vmatpush1.msra.mxu0 %v1254
  %1353 = vmatprep.subr.mxu0 %v1251
  %1354 = vmatpush1.msra.mxu0 %v1250
  %1355 = vmatprep.subr.mxu0 %v1247
  %1356 = vmatpush1.msra.mxu0 %v1246
  %1357 = vmatprep.subr.mxu0 %v1243
  %1358 = vmatpush1.msra.mxu0 %v1242
  %1359 = vmatprep.subr.mxu0 %v1239
  %1360 = vmatpush1.msra.mxu0 %v1238
  %1361 = vmatprep.subr.mxu0 %v1235
  %1362 = vmatpush1.msra.mxu0 %v1234
  %1363 = vmatprep.subr.mxu0 %v1231
  %1364 = vmatpush1.msra.mxu0 %v1230
  %1365 = vmatprep.subr.mxu0 %v1227
  %1366 = vmatpush1.msra.mxu0 %v1226
  %1367 = vmatprep.subr.mxu0 %v1223
  %1368 = vmatpush1.msra.mxu0 %v1222
  %1369 = vmatprep.subr.mxu0 %v1219
  %1370 = vmatpush1.msra.mxu0 %v1218
  %1371 = vmatprep.subr.mxu0 %v1215
  %1372 = vmatpush1.msra.mxu0 %v1214
  %1373 = vmatprep.subr.mxu0 %v1211
  %1374 = vmatpush1.msra.mxu0 %v1210
  %1375 = vmatprep.subr.mxu0 0.0
  %1376 = vmatpush2.msra.mxu0 0.0
  %1377 = vmatprep.subr.mxu0 0.0
  %1378 = vmatpush2.msra.mxu0 0.0
  %1379 = vmatprep.subr.mxu0 0.0
  %1380 = vmatpush2.msra.mxu0 0.0
  %1381 = vmatprep.subr.mxu0 0.0
  %1382 = vmatpush2.msra.mxu0 0.0
  %1383 = vmatprep.subr.mxu0 0.0
  %1384 = vmatpush2.msra.mxu0 0.0
  %1385 = vmatprep.subr.mxu0 0.0
  %1386 = vmatpush2.msra.mxu0 0.0
  %1387 = vmatprep.subr.mxu0 0.0
  %1388 = vmatpush2.msra.mxu0 0.0
  %1389 = vmatprep.subr.mxu0 0.0
  %1390 = vmatpush2.msra.mxu0 0.0
  %1391 = vmatprep.subr.mxu0 0.0
  %1392 = vmatpush2.msra.mxu0 0.0
  %1393 = vmatprep.subr.mxu0 0.0
  %1394 = vmatpush2.msra.mxu0 0.0
  %1395 = vmatprep.subr.mxu0 0.0
  %1396 = vmatpush2.msra.mxu0 0.0
  %1397 = vmatprep.subr.mxu0 0.0
  %1398 = vmatpush2.msra.mxu0 0.0
  %1399 = vmatprep.subr.mxu0 0.0
  %1400 = vmatpush2.msra.mxu0 0.0
  %1401 = vmatprep.subr.mxu0 0.0
  %1402 = vmatpush2.msra.mxu0 0.0
  %1403 = vmatprep.subr.mxu0 0.0
  %1404 = vmatpush2.msra.mxu0 0.0
  %1405 = vmatprep.subr.mxu0 0.0
  %1406 = vmatpush2.msra.mxu0 0.0
  %1407 = vmatprep.mubr.f32.mxu0 0.0
  %1408 = vmatmul.mubr.f32.gmra.mxu0 %v1200
  %v1409 = vpop.f32.mrf.mxu0
  %v1410 = vadd.f32 0.0, %v1409
  %v1411 = vpop.f32.mrf.mxu0
  %v1412 = vadd.f32 0.0, %v1411
  %1413 = vdwg.mxu0
  %v1414 = vadd.f32 %v1204, %v1339
  %v1415 = vadd.f32 %v1205, %v1341
  %v1416 = vadd.f32 %v1206, %v1410
  %v1417 = vadd.f32 %v1207, %v1412
  %v1418 = vmul.f32 %v1414, 0.5
  %v1419 = vtanh.pop %v1418
  %v1420 = vadd.f32 %v1419, 1.0
  %v1421 = vmul.f32 %v1420, 0.5
  %v1422 = vmul.f32 %v1415, 0.5
  %v1423 = vtanh.pop %v1422
  %v1424 = vadd.f32 %v1423, 1.0
  %v1425 = vmul.f32 %v1424, 0.5
  %v1426 = vtanh.pop %v1416
  %v1427 = vmul.f32 %v1417, 0.5
  %v1428 = vtanh.pop %v1427
  %v1429 = vadd.f32 %v1428, 1.0
  %v1430 = vmul.f32 %v1429, 0.5
  %v1431 = vmul.f32 %v1425, %v1198
  %v1432 = vmul.f32 %v1421, %v1426
  %v1433 = vadd.f32 %v1431, %v1432
  %v1434 = vtanh.pop %v1433
  %v1435 = vmul.f32 %v1430, %v1434
  %s1436 = scalar_lea.vmem %s4, 40
  %1437 = vst [vmem:[%s1436] sm:$0xff] %v1435
  %s1438 = scalar_lea.vmem %s0, 192
  %v1439 = vld [vmem:[%s1438] sm:$0xff]
  %v1440 = vld [vmem:[%s1438 + $0x8] sm:$0xff]
  %v1441 = vld [vmem:[%s1438 + $0x10] sm:$0xff]
  %v1442 = vld [vmem:[%s1438 + $0x18] sm:$0xff]
  %v1443 = vld [vmem:[%s1] sm:$0xff]
  %v1444 = vld [vmem:[%s1 + $0x8] sm:$0xff]
  %v1445 = vld [vmem:[%s1 + $0x10] sm:$0xff]
  %v1446 = vld [vmem:[%s1 + $0x18] sm:$0xff]
  %v1447 = vld [vmem:[%s1 + $0x20] sm:$0xff]
  %v1448 = vld [vmem:[%s1 + $0x28] sm:$0xff]
  %v1449 = vld [vmem:[%s1 + $0x30] sm:$0xff]
  %v1450 = vld [vmem:[%s1 + $0x38] sm:$0xff]
  %v1451 = vld [vmem:[%s1 + $0x40] sm:$0xff]
  %v1452 = vld [vmem:[%s1 + $0x48] sm:$0xff]
  %v1453 = vld [vmem:[%s1 + $0x50] sm:$0xff]
  %v1454 = vld [vmem:[%s1 + $0x58] sm:$0xff]
  %v1455 = vld [vmem:[%s1 + $0x60] sm:$0xff]
  %v1456 = vld [vmem:[%s1 + $0x68] sm:$0xff]
  %v1457 = vld [vmem:[%s1 + $0x70] sm:$0xff]
  %v1458 = vld [vmem:[%s1 + $0x78] sm:$0xff]
  %v1459 = vld [vmem:[%s1 + $0x80] sm:$0xff]
  %v1460 = vld [vmem:[%s1 + $0x88] sm:$0xff]
  %v1461 = vld [vmem:[%s1 + $0x90] sm:$0xff]
  %v1462 = vld [vmem:[%s1 + $0x98] sm:$0xff]
  %v1463 = vld [vmem:[%s1 + $0xa0] sm:$0xff]
  %v1464 = vld [vmem:[%s1 + $0xa8] sm:$0xff]
  %v1465 = vld [vmem:[%s1 + $0xb0] sm:$0xff]
  %v1466 = vld [vmem:[%s1 + $0xb8] sm:$0xff]
  %v1467 = vld [vmem:[%s1 + $0xc0] sm:$0xff]
  %v1468 = vld [vmem:[%s1 + $0xc8] sm:$0xff]
  %v1469 = vld [vmem:[%s1 + $0xd0] sm:$0xff]
  %v1470 = vld [vmem:[%s1 + $0xd8] sm:$0xff]
  %v1471 = vld [vmem:[%s1 + $0xe0] sm:$0xff]
  %v1472 = vld [vmem:[%s1 + $0xe8] sm:$0xff]
  %v1473 = vld [vmem:[%s1 + $0xf0] sm:$0xff]
  %v1474 = vld [vmem:[%s1 + $0xf8] sm:$0xff]
  %v1475 = vld [vmem:[%s1 + $0x100] sm:$0xff]
  %v1476 = vld [vmem:[%s1 + $0x108] sm:$0xff]
  %v1477 = vld [vmem:[%s1 + $0x110] sm:$0xff]
  %v1478 = vld [vmem:[%s1 + $0x118] sm:$0xff]
  %v1479 = vld [vmem:[%s1 + $0x120] sm:$0xff]
  %v1480 = vld [vmem:[%s1 + $0x128] sm:$0xff]
  %v1481 = vld [vmem:[%s1 + $0x130] sm:$0xff]
  %v1482 = vld [vmem:[%s1 + $0x138] sm:$0xff]
  %v1483 = vld [vmem:[%s1 + $0x140] sm:$0xff]
  %v1484 = vld [vmem:[%s1 + $0x148] sm:$0xff]
  %v1485 = vld [vmem:[%s1 + $0x150] sm:$0xff]
  %v1486 = vld [vmem:[%s1 + $0x158] sm:$0xff]
  %v1487 = vld [vmem:[%s1 + $0x160] sm:$0xff]
  %v1488 = vld [vmem:[%s1 + $0x168] sm:$0xff]
  %v1489 = vld [vmem:[%s1 + $0x170] sm:$0xff]
  %v1490 = vld [vmem:[%s1 + $0x178] sm:$0xff]
  %v1491 = vld [vmem:[%s1 + $0x180] sm:$0xff]
  %v1492 = vld [vmem:[%s1 + $0x188] sm:$0xff]
  %v1493 = vld [vmem:[%s1 + $0x190] sm:$0xff]
  %v1494 = vld [vmem:[%s1 + $0x198] sm:$0xff]
  %v1495 = vld [vmem:[%s1 + $0x1a0] sm:$0xff]
  %v1496 = vld [vmem:[%s1 + $0x1a8] sm:$0xff]
  %v1497 = vld [vmem:[%s1 + $0x1b0] sm:$0xff]
  %v1498 = vld [vmem:[%s1 + $0x1b8] sm:$0xff]
  %v1499 = vld [vmem:[%s1 + $0x1c0] sm:$0xff]
  %v1500 = vld [vmem:[%s1 + $0x1c8] sm:$0xff]
  %v1501 = vld [vmem:[%s1 + $0x1d0] sm:$0xff]
  %v1502 = vld [vmem:[%s1 + $0x1d8] sm:$0xff]
  %v1503 = vld [vmem:[%s1 + $0x1e0] sm:$0xff]
  %v1504 = vld [vmem:[%s1 + $0x1e8] sm:$0xff]
  %v1505 = vld [vmem:[%s1 + $0x1f0] sm:$0xff]
  %v1506 = vld [vmem:[%s1 + $0x1f8] sm:$0xff]
  %1507 = vmatprep.subr.mxu0 %v1504
  %1508 = vmatpush1.msra.mxu0 %v1503
  %1509 = vmatprep.subr.mxu0 %v1500
  %1510 = vmatpush1.msra.mxu0 %v1499
  %1511 = vmatprep.subr.mxu0 %v1496
  %1512 = vmatpush1.msra.mxu0 %v1495
  %1513 = vmatprep.subr.mxu0 %v1492
  %1514 = vmatpush1.msra.mxu0 %v1491
  %1515 = vmatprep.subr.mxu0 %v1488
  %1516 = vmatpush1.msra.mxu0 %v1487
  %1517 = vmatprep.subr.mxu0 %v1484
  %1518 = vmatpush1.msra.mxu0 %v1483
  %1519 = vmatprep.subr.mxu0 %v1480
  %1520 = vmatpush1.msra.mxu0 %v1479
  %1521 = vmatprep.subr.mxu0 %v1476
  %1522 = vmatpush1.msra.mxu0 %v1475
  %1523 = vmatprep.subr.mxu0 %v1472
  %1524 = vmatpush1.msra.mxu0 %v1471
  %1525 = vmatprep.subr.mxu0 %v1468
  %1526 = vmatpush1.msra.mxu0 %v1467
  %1527 = vmatprep.subr.mxu0 %v1464
  %1528 = vmatpush1.msra.mxu0 %v1463
  %1529 = vmatprep.subr.mxu0 %v1460
  %1530 = vmatpush1.msra.mxu0 %v1459
  %1531 = vmatprep.subr.mxu0 %v1456
  %1532 = vmatpush1.msra.mxu0 %v1455
  %1533 = vmatprep.subr.mxu0 %v1452
  %1534 = vmatpush1.msra.mxu0 %v1451
  %1535 = vmatprep.subr.mxu0 %v1448
  %1536 = vmatpush1.msra.mxu0 %v1447
  %1537 = vmatprep.subr.mxu0 %v1444
  %1538 = vmatpush1.msra.mxu0 %v1443
  %1539 = vmatprep.subr.mxu0 0.0
  %1540 = vmatpush2.msra.mxu0 0.0
  %1541 = vmatprep.subr.mxu0 0.0
  %1542 = vmatpush2.msra.mxu0 0.0
  %1543 = vmatprep.subr.mxu0 0.0
  %1544 = vmatpush2.msra.mxu0 0.0
  %1545 = vmatprep.subr.mxu0 0.0
  %1546 = vmatpush2.msra.mxu0 0.0
  %1547 = vmatprep.subr.mxu0 0.0
  %1548 = vmatpush2.msra.mxu0 0.0
  %1549 = vmatprep.subr.mxu0 0.0
  %1550 = vmatpush2.msra.mxu0 0.0
  %1551 = vmatprep.subr.mxu0 0.0
  %1552 = vmatpush2.msra.mxu0 0.0
  %1553 = vmatprep.subr.mxu0 0.0
  %1554 = vmatpush2.msra.mxu0 0.0
  %1555 = vmatprep.subr.mxu0 0.0
  %1556 = vmatpush2.msra.mxu0 0.0
  %1557 = vmatprep.subr.mxu0 0.0
  %1558 = vmatpush2.msra.mxu0 0.0
  %1559 = vmatprep.subr.mxu0 0.0
  %1560 = vmatpush2.msra.mxu0 0.0
  %1561 = vmatprep.subr.mxu0 0.0
  %1562 = vmatpush2.msra.mxu0 0.0
  %1563 = vmatprep.subr.mxu0 0.0
  %1564 = vmatpush2.msra.mxu0 0.0
  %1565 = vmatprep.subr.mxu0 0.0
  %1566 = vmatpush2.msra.mxu0 0.0
  %1567 = vmatprep.subr.mxu0 0.0
  %1568 = vmatpush2.msra.mxu0 0.0
  %1569 = vmatprep.subr.mxu0 0.0
  %1570 = vmatpush2.msra.mxu0 0.0
  %1571 = vmatprep.mubr.f32.mxu0 0.0
  %1572 = vmatmul.mubr.f32.gmra.mxu0 %v1435
  %v1573 = vpop.f32.mrf.mxu0
  %v1574 = vadd.f32 0.0, %v1573
  %v1575 = vpop.f32.mrf.mxu0
  %v1576 = vadd.f32 0.0, %v1575
  %1577 = vdwg.mxu0
  %1578 = vmatprep.subr.mxu0 %v1506
  %1579 = vmatpush1.msra.mxu0 %v1505
  %1580 = vmatprep.subr.mxu0 %v1502
  %1581 = vmatpush1.msra.mxu0 %v1501
  %1582 = vmatprep.subr.mxu0 %v1498
  %1583 = vmatpush1.msra.mxu0 %v1497
  %1584 = vmatprep.subr.mxu0 %v1494
  %1585 = vmatpush1.msra.mxu0 %v1493
  %1586 = vmatprep.subr.mxu0 %v1490
  %1587 = vmatpush1.msra.mxu0 %v1489
  %1588 = vmatprep.subr.mxu0 %v1486
  %1589 = vmatpush1.msra.mxu0 %v1485
  %1590 = vmatprep.subr.mxu0 %v1482
  %1591 = vmatpush1.msra.mxu0 %v1481
  %1592 = vmatprep.subr.mxu0 %v1478
  %1593 = vmatpush1.msra.mxu0 %v1477
  %1594 = vmatprep.subr.mxu0 %v1474
  %1595 = vmatpush1.msra.mxu0 %v1473
  %1596 = vmatprep.subr.mxu0 %v1470
  %1597 = vmatpush1.msra.mxu0 %v1469
  %1598 = vmatprep.subr.mxu0 %v1466
  %1599 = vmatpush1.msra.mxu0 %v1465
  %1600 = vmatprep.subr.mxu0 %v1462
  %1601 = vmatpush1.msra.mxu0 %v1461
  %1602 = vmatprep.subr.mxu0 %v1458
  %1603 = vmatpush1.msra.mxu0 %v1457
  %1604 = vmatprep.subr.mxu0 %v1454
  %1605 = vmatpush1.msra.mxu0 %v1453
  %1606 = vmatprep.subr.mxu0 %v1450
  %1607 = vmatpush1.msra.mxu0 %v1449
  %1608 = vmatprep.subr.mxu0 %v1446
  %1609 = vmatpush1.msra.mxu0 %v1445
  %1610 = vmatprep.subr.mxu0 0.0
  %1611 = vmatpush2.msra.mxu0 0.0
  %1612 = vmatprep.subr.mxu0 0.0
  %1613 = vmatpush2.msra.mxu0 0.0
  %1614 = vmatprep.subr.mxu0 0.0
  %1615 = vmatpush2.msra.mxu0 0.0
  %1616 = vmatprep.subr.mxu0 0.0
  %1617 = vmatpush2.msra.mxu0 0.0
  %1618 = vmatprep.subr.mxu0 0.0
  %1619 = vmatpush2.msra.mxu0 0.0
  %1620 = vmatprep.subr.mxu0 0.0
  %1621 = vmatpush2.msra.mxu0 0.0
  %1622 = vmatprep.subr.mxu0 0.0
  %1623 = vmatpush2.msra.mxu0 0.0
  %1624 = vmatprep.subr.mxu0 0.0
  %1625 = vmatpush2.msra.mxu0 0.0
  %1626 = vmatprep.subr.mxu0 0.0
  %1627 = vmatpush2.msra.mxu0 0.0
  %1628 = vmatprep.subr.mxu0 0.0
  %1629 = vmatpush2.msra.mxu0 0.0
  %1630 = vmatprep.subr.mxu0 0.0
  %1631 = vmatpush2.msra.mxu0 0.0
  %1632 = vmatprep.subr.mxu0 0.0
  %1633 = vmatpush2.msra.mxu0 0.0
  %1634 = vmatprep.subr.mxu0 0.0
  %1635 = vmatpush2.msra.mxu0 0.0
  %1636 = vmatprep.subr.mxu0 0.0
  %1637 = vmatpush2.msra.mxu0 0.0
  %1638 = vmatprep.subr.mxu0 0.0
  %1639 = vmatpush2.msra.mxu0 0.0
  %1640 = vmatprep.subr.mxu0 0.0
  %1641 = vmatpush2.msra.mxu0 0.0
  %1642 = vmatprep.mubr.f32.mxu0 0.0
  %1643 = vmatmul.mubr.f32.gmra.mxu0 %v1435
  %v1644 = vpop.f32.mrf.mxu0
  %v1645 = vadd.f32 0.0, %v1644
  %v1646 = vpop.f32.mrf.mxu0
  %v1647 = vadd.f32 0.0, %v1646
  %1648 = vdwg.mxu0
  %v1649 = vadd.f32 %v1439, %v1574
  %v1650 = vadd.f32 %v1440, %v1576
  %v1651 = vadd.f32 %v1441, %v1645
  %v1652 = vadd.f32 %v1442, %v1647
  %v1653 = vmul.f32 %v1649, 0.5
  %v1654 = vtanh.pop %v1653
  %v1655 = vadd.f32 %v1654, 1.0
  %v1656 = vmul.f32 %v1655, 0.5
  %v1657 = vmul.f32 %v1650, 0.5
  %v1658 = vtanh.pop %v1657
  %v1659 = vadd.f32 %v1658, 1.0
  %v1660 = vmul.f32 %v1659, 0.5
  %v1661 = vtanh.pop %v1651
  %v1662 = vmul.f32 %v1652, 0.5
  %v1663 = vtanh.pop %v1662
  %v1664 = vadd.f32 %v1663, 1.0
  %v1665 = vmul.f32 %v1664, 0.5
  %v1666 = vmul.f32 %v1660, %v1433
  %v1667 = vmul.f32 %v1656, %v1661
  %v1668 = vadd.f32 %v1666, %v1667
  %v1669 = vtanh.pop %v1668
  %v1670 = vmul.f32 %v1665, %v1669
  %s1671 = scalar_lea.vmem %s4, 48
  %1672 = vst [vmem:[%s1671] sm:$0xff] %v1670
  %s1673 = scalar_lea.vmem %s0, 224
  %v1674 = vld [vmem:[%s1673] sm:$0xff]
  %v1675 = vld [vmem:[%s1673 + $0x8] sm:$0xff]
  %v1676 = vld [vmem:[%s1673 + $0x10] sm:$0xff]
  %v1677 = vld [vmem:[%s1673 + $0x18] sm:$0xff]
  %v1678 = vld [vmem:[%s1] sm:$0xff]
  %v1679 = vld [vmem:[%s1 + $0x8] sm:$0xff]
  %v1680 = vld [vmem:[%s1 + $0x10] sm:$0xff]
  %v1681 = vld [vmem:[%s1 + $0x18] sm:$0xff]
  %v1682 = vld [vmem:[%s1 + $0x20] sm:$0xff]
  %v1683 = vld [vmem:[%s1 + $0x28] sm:$0xff]
  %v1684 = vld [vmem:[%s1 + $0x30] sm:$0xff]
  %v1685 = vld [vmem:[%s1 + $0x38] sm:$0xff]
  %v1686 = vld [vmem:[%s1 + $0x40] sm:$0xff]
  %v1687 = vld [vmem:[%s1 + $0x48] sm:$0xff]
  %v1688 = vld [vmem:[%s1 + $0x50] sm:$0xff]
  %v1689 = vld [vmem:[%s1 + $0x58] sm:$0xff]
  %v1690 = vld [vmem:[%s1 + $0x60] sm:$0xff]
  %v1691 = vld [vmem:[%s1 + $0x68] sm:$0xff]
  %v1692 = vld [vmem:[%s1 + $0x70] sm:$0xff]
  %v1693 = vld [vmem:[%s1 + $0x78] sm:$0xff]
  %v1694 = vld [vmem:[%s1 + $0x80] sm:$0xff]
  %v1695 = vld [vmem:[%s1 + $0x88] sm:$0xff]
  %v1696 = vld [vmem:[%s1 + $0x90] sm:$0xff]
  %v1697 = vld [vmem:[%s1 + $0x98] sm:$0xff]
  %v1698 = vld [vmem:[%s1 + $0xa0] sm:$0xff]
  %v1699 = vld [vmem:[%s1 + $0xa8] sm:$0xff]
  %v1700 = vld [vmem:[%s1 + $0xb0] sm:$0xff]
  %v1701 = vld [vmem:[%s1 + $0xb8] sm:$0xff]
  %v1702 = vld [vmem:[%s1 + $0xc0] sm:$0xff]
  %v1703 = vld [vmem:[%s1 + $0xc8] sm:$0xff]
  %v1704 = vld [vmem:[%s1 + $0xd0] sm:$0xff]
  %v1705 = vld [vmem:[%s1 + $0xd8] sm:$0xff]
  %v1706 = vld [vmem:[%s1 + $0xe0] sm:$0xff]
  %v1707 = vld [vmem:[%s1 + $0xe8] sm:$0xff]
  %v1708 = vld [vmem:[%s1 + $0xf0] sm:$0xff]
  %v1709 = vld [vmem:[%s1 + $0xf8] sm:$0xff]
  %v1710 = vld [vmem:[%s1 + $0x100] sm:$0xff]
  %v1711 = vld [vmem:[%s1 + $0x108] sm:$0xff]
  %v1712 = vld [vmem:[%s1 + $0x110] sm:$0xff]
  %v1713 = vld [vmem:[%s1 + $0x118] sm:$0xff]
  %v1714 = vld [vmem:[%s1 + $0x120] sm:$0xff]
  %v1715 = vld [vmem:[%s1 + $0x128] sm:$0xff]
  %v1716 = vld [vmem:[%s1 + $0x130] sm:$0xff]
  %v1717 = vld [vmem:[%s1 + $0x138] sm:$0xff]
  %v1718 = vld [vmem:[%s1 + $0x140] sm:$0xff]
  %v1719 = vld [vmem:[%s1 + $0x148] sm:$0xff]
  %v1720 = vld [vmem:[%s1 + $0x150] sm:$0xff]
  %v1721 = vld [vmem:[%s1 + $0x158] sm:$0xff]
  %v1722 = vld [vmem:[%s1 + $0x160] sm:$0xff]
  %v1723 = vld [vmem:[%s1 + $0x168] sm:$0xff]
  %v1724 = vld [vmem:[%s1 + $0x170] sm:$0xff]
  %v1725 = vld [vmem:[%s1 + $0x178] sm:$0xff]
  %v1726 = vld [vmem:[%s1 + $0x180] sm:$0xff]
  %v1727 = vld [vmem:[%s1 + $0x188] sm:$0xff]
  %v1728 = vld [vmem:[%s1 + $0x190] sm:$0xff]
  %v1729 = vld [vmem:[%s1 + $0x198] sm:$0xff]
  %v1730 = vld [vmem:[%s1 + $0x1a0] sm:$0xff]
  %v1731 = vld [vmem:[%s1 + $0x1a8] sm:$0xff]
  %v1732 = vld [vmem:[%s1 + $0x1b0] sm:$0xff]
  %v1733 = vld [vmem:[%s1 + $0x1b8] sm:$0xff]
  %v1734 = vld [vmem:[%s1 + $0x1c0] sm:$0xff]
  %v1735 = vld [vmem:[%s1 + $0x1c8] sm:$0xff]
  %v1736 = vld [vmem:[%s1 + $0x1d0] sm:$0xff]
  %v1737 = vld [vmem:[%s1 + $0x1d8] sm:$0xff]
  %v1738 = vld [vmem:[%s1 + $0x1e0] sm:$0xff]
  %v1739 = vld [vmem:[%s1 + $0x1e8] sm:$0xff]
  %v1740 = vld [vmem:[%s1 + $0x1f0] sm:$0xff]
  %v1741 = vld [vmem:[%s1 + $0x1f8] sm:$0xff]
  %1742 = vmatprep.subr.mxu0 %v1739
  %1743 = vmatpush1.msra.mxu0 %v1738
  %1744 = vmatprep.subr.mxu0 %v1735
  %1745 = vmatpush1.msra.mxu0 %v1734
  %1746 = vmatprep.subr.mxu0 %v1731
  %1747 = vmatpush1.msra.mxu0 %v1730
  %1748 = vmatprep.subr.mxu0 %v1727
  %1749 = vmatpush1.msra.mxu0 %v1726
  %1750 = vmatprep.subr.mxu0 %v1723
  %1751 = vmatpush1.msra.mxu0 %v1722
  %1752 = vmatprep.subr.mxu0 %v1719
  %1753 = vmatpush1.msra.mxu0 %v1718
  %1754 = vmatprep.subr.mxu0 %v1715
  %1755 = vmatpush1.msra.mxu0 %v1714
  %1756 = vmatprep.subr.mxu0 %v1711
  %1757 = vmatpush1.msra.mxu0 %v1710
  %1758 = vmatprep.subr.mxu0 %v1707
  %1759 = vmatpush1.msra.mxu0 %v1706
  %1760 = vmatprep.subr.mxu0 %v1703
  %1761 = vmatpush1.msra.mxu0 %v1702
  %1762 = vmatprep.subr.mxu0 %v1699
  %1763 = vmatpush1.msra.mxu0 %v1698
  %1764 = vmatprep.subr.mxu0 %v1695
  %1765 = vmatpush1.msra.mxu0 %v1694
  %1766 = vmatprep.subr.mxu0 %v1691
  %1767 = vmatpush1.msra.mxu0 %v1690
  %1768 = vmatprep.subr.mxu0 %v1687
  %1769 = vmatpush1.msra.mxu0 %v1686
  %1770 = vmatprep.subr.mxu0 %v1683
  %1771 = vmatpush1.msra.mxu0 %v1682
  %1772 = vmatprep.subr.mxu0 %v1679
  %1773 = vmatpush1.msra.mxu0 %v1678
  %1774 = vmatprep.subr.mxu0 0.0
  %1775 = vmatpush2.msra.mxu0 0.0
  %1776 = vmatprep.subr.mxu0 0.0
  %1777 = vmatpush2.msra.mxu0 0.0
  %1778 = vmatprep.subr.mxu0 0.0
  %1779 = vmatpush2.msra.mxu0 0.0
  %1780 = vmatprep.subr.mxu0 0.0
  %1781 = vmatpush2.msra.mxu0 0.0
  %1782 = vmatprep.subr.mxu0 0.0
  %1783 = vmatpush2.msra.mxu0 0.0
  %1784 = vmatprep.subr.mxu0 0.0
  %1785 = vmatpush2.msra.mxu0 0.0
  %1786 = vmatprep.subr.mxu0 0.0
  %1787 = vmatpush2.msra.mxu0 0.0
  %1788 = vmatprep.subr.mxu0 0.0
  %1789 = vmatpush2.msra.mxu0 0.0
  %1790 = vmatprep.subr.mxu0 0.0
  %1791 = vmatpush2.msra.mxu0 0.0
  %1792 = vmatprep.subr.mxu0 0.0
  %1793 = vmatpush2.msra.mxu0 0.0
  %1794 = vmatprep.subr.mxu0 0.0
  %1795 = vmatpush2.msra.mxu0 0.0
  %1796 = vmatprep.subr.mxu0 0.0
  %1797 = vmatpush2.msra.mxu0 0.0
  %1798 = vmatprep.subr.mxu0 0.0
  %1799 = vmatpush2.msra.mxu0 0.0
  %1800 = vmatprep.subr.mxu0 0.0
  %1801 = vmatpush2.msra.mxu0 0.0
  %1802 = vmatprep.subr.mxu0 0.0
  %1803 = vmatpush2.msra.mxu0 0.0
  %1804 = vmatprep.subr.mxu0 0.0
  %1805 = vmatpush2.msra.mxu0 0.0
  %1806 = vmatprep.mubr.f32.mxu0 0.0
  %1807 = vmatmul.mubr.f32.gmra.mxu0 %v1670
  %v1808 = vpop.f32.mrf.mxu0
  %v1809 = vadd.f32 0.0, %v1808
  %v1810 = vpop.f32.mrf.mxu0
  %v1811 = vadd.f32 0.0, %v1810
  %1812 = vdwg.mxu0
  %1813 = vmatprep.subr.mxu0 %v1741
  %1814 = vmatpush1.msra.mxu0 %v1740
  %1815 = vmatprep.subr.mxu0 %v1737
  %1816 = vmatpush1.msra.mxu0 %v1736
  %1817 = vmatprep.subr.mxu0 %v1733
  %1818 = vmatpush1.msra.mxu0 %v1732
  %1819 = vmatprep.subr.mxu0 %v1729
  %1820 = vmatpush1.msra.mxu0 %v1728
  %1821 = vmatprep.subr.mxu0 %v1725
  %1822 = vmatpush1.msra.mxu0 %v1724
  %1823 = vmatprep.subr.mxu0 %v1721
  %1824 = vmatpush1.msra.mxu0 %v1720
  %1825 = vmatprep.subr.mxu0 %v1717
  %1826 = vmatpush1.msra.mxu0 %v1716
  %1827 = vmatprep.subr.mxu0 %v1713
  %1828 = vmatpush1.msra.mxu0 %v1712
  %1829 = vmatprep.subr.mxu0 %v1709
  %1830 = vmatpush1.msra.mxu0 %v1708
  %1831 = vmatprep.subr.mxu0 %v1705
  %1832 = vmatpush1.msra.mxu0 %v1704
  %1833 = vmatprep.subr.mxu0 %v1701
  %1834 = vmatpush1.msra.mxu0 %v1700
  %1835 = vmatprep.subr.mxu0 %v1697
  %1836 = vmatpush1.msra.mxu0 %v1696
  %1837 = vmatprep.subr.mxu0 %v1693
  %1838 = vmatpush1.msra.mxu0 %v1692
  %1839 = vmatprep.subr.mxu0 %v1689
  %1840 = vmatpush1.msra.mxu0 %v1688
  %1841 = vmatprep.subr.mxu0 %v1685
  %1842 = vmatpush1.msra.mxu0 %v1684
  %1843 = vmatprep.subr.mxu0 %v1681
  %1844 = vmatpush1.msra.mxu0 %v1680
  %1845 = vmatprep.subr.mxu0 0.0
  %1846 = vmatpush2.msra.mxu0 0.0
  %1847 = vmatprep.subr.mxu0 0.0
  %1848 = vmatpush2.msra.mxu0 0.0
  %1849 = vmatprep.subr.mxu0 0.0
  %1850 = vmatpush2.msra.mxu0 0.0
  %1851 = vmatprep.subr.mxu0 0.0
  %1852 = vmatpush2.msra.mxu0 0.0
  %1853 = vmatprep.subr.mxu0 0.0
  %1854 = vmatpush2.msra.mxu0 0.0
  %1855 = vmatprep.subr.mxu0 0.0
  %1856 = vmatpush2.msra.mxu0 0.0
  %1857 = vmatprep.subr.mxu0 0.0
  %1858 = vmatpush2.msra.mxu0 0.0
  %1859 = vmatprep.subr.mxu0 0.0
  %1860 = vmatpush2.msra.mxu0 0.0
  %1861 = vmatprep.subr.mxu0 0.0
  %1862 = vmatpush2.msra.mxu0 0.0
  %1863 = vmatprep.subr.mxu0 0.0
  %1864 = vmatpush2.msra.mxu0 0.0
  %1865 = vmatprep.subr.mxu0 0.0
  %1866 = vmatpush2.msra.mxu0 0.0
  %1867 = vmatprep.subr.mxu0 0.0
  %1868 = vmatpush2.msra.mxu0 0.0
  %1869 = vmatprep.subr.mxu0 0.0
  %1870 = vmatpush2.msra.mxu0 0.0
  %1871 = vmatprep.subr.mxu0 0.0
  %1872 = vmatpush2.msra.mxu0 0.0
  %1873 = vmatprep.subr.mxu0 0.0
  %1874 = vmatpush2.msra.mxu0 0.0
  %1875 = vmatprep.subr.mxu0 0.0
  %1876 = vmatpush2.msra.mxu0 0.0
  %1877 = vmatprep.mubr.f32.mxu0 0.0
  %1878 = vmatmul.mubr.f32.gmra.mxu0 %v1670
  %v1879 = vpop.f32.mrf.mxu0
  %v1880 = vadd.f32 0.0, %v1879
  %v1881 = vpop.f32.mrf.mxu0
  %v1882 = vadd.f32 0.0, %v1881
  %1883 = vdwg.mxu0
  %v1884 = vadd.f32 %v1674, %v1809
  %v1885 = vadd.f32 %v1675, %v1811
  %v1886 = vadd.f32 %v1676, %v1880
  %v1887 = vadd.f32 %v1677, %v1882
  %v1888 = vmul.f32 %v1884, 0.5
  %v1889 = vtanh.pop %v1888
  %v1890 = vadd.f32 %v1889, 1.0
  %v1891 = vmul.f32 %v1890, 0.5
  %v1892 = vmul.f32 %v1885, 0.5
  %v1893 = vtanh.pop %v1892
  %v1894 = vadd.f32 %v1893, 1.0
  %v1895 = vmul.f32 %v1894, 0.5
  %v1896 = vtanh.pop %v1886
  %v1897 = vmul.f32 %v1887, 0.5
  %v1898 = vtanh.pop %v1897
  %v1899 = vadd.f32 %v1898, 1.0
  %v1900 = vmul.f32 %v1899, 0.5
  %v1901 = vmul.f32 %v1895, %v1668
  %v1902 = vmul.f32 %v1891, %v1896
  %v1903 = vadd.f32 %v1901, %v1902
  %v1904 = vtanh.pop %v1903
  %v1905 = vmul.f32 %v1900, %v1904
  %s1906 = scalar_lea.vmem %s4, 56
  %1907 = vst [vmem:[%s1906] sm:$0xff] %v1905
  %1908 = vst [vmem:[#allocation2] sm:$0xff] %v1905
  %1909 = vst [vmem:[#allocation3] sm:$0xff] %v1903
  // Predicated region
  $region22: #{lstm_pallas.1} parent=0 // pred_check
    %p1910 = pneg %p20
  $region23: #{lstm_pallas.1} parent=0 // pred_check_branch
    %1912 = sbr.rel (%p1910) target = $region25
  $region24: #{lstm_pallas.1} parent=0 // pred_region
    %1913 = vst [vmem:[%s5] sm:$0xff] %v1905
    %1914 = vst [vmem:[%s6] sm:$0xff] %v1903
  $region25: #{lstm_pallas.1} parent=0 // pred_fallthru
    _
  // Predicated region
  $region26: #{lstm_pallas.1} parent=0 // pred_check
    _
  $region27: #{lstm_pallas.1} parent=0 // pred_check_branch
    %1916 = sbr.rel (0) target = $region29
  $region28: #{lstm_pallas.1} parent=0 // pred_region
    _
  $region29: #{lstm_pallas.1} parent=0 // pred_fallthru
    _
  // Predicated region
  $region30: #{lstm_pallas.1} parent=0 // pred_check
    _
  $region31: #{lstm_pallas.1} parent=0 // pred_check_branch
    %1918 = sbr.rel (0) target = $region33
  $region32: #{lstm_pallas.1} parent=0 // pred_region
    _
  $region33: #{lstm_pallas.1} parent=0 // pred_fallthru
    _
  // Predicated region
  $region34: #{lstm_pallas.1} parent=0 // pred_check
    _
  $region35: #{lstm_pallas.1} parent=0 // pred_check_branch
    %1920 = sbr.rel (0) target = $region37
  $region36: #{lstm_pallas.1} parent=0 // pred_region
    _
  $region37: #{lstm_pallas.1} parent=0 // pred_fallthru
    _
  // Predicated region
  $region38: #{lstm_pallas.1} parent=0 // pred_check
    _
  $region39: #{lstm_pallas.1} parent=0 // pred_check_branch
    %1922 = sbr.rel (0) target = $region41
  $region40: #{lstm_pallas.1} parent=0 // pred_region
    _
  $region41: #{lstm_pallas.1} parent=0 // pred_fallthru
    _
  // Predicated region
  $region42: #{lstm_pallas.1} parent=0 // pred_check
    _
  $region43: #{lstm_pallas.1} parent=0 // pred_check_branch
    %1924 = sbr.rel (0) target = $region45
  $region44: #{lstm_pallas.1} parent=0 // pred_region
    _
  $region45: #{lstm_pallas.1} parent=0 // pred_fallthru
    _
  // Predicated region
  $region46: #{lstm_pallas.1} parent=0 // pred_check
    _
  $region47: #{lstm_pallas.1} parent=0 // pred_check_branch
    %1926 = sbr.rel (0) target = $region49
  $region48: #{lstm_pallas.1} parent=0 // pred_region
    _
  $region49: #{lstm_pallas.1} parent=0 // pred_fallthru
    _

</llo_original>
